<compile_context>
chip_gen: v7x
topology: tpu7x:2x2x1
jax: 0.10.0
libtpu: 0.0.40
codegen_flags: <defaults>
</compile_context>

<pallas_src>
import functools

import jax
import jax.numpy as jnp
from jax import lax
from jax.experimental import pallas as pl
from jax.experimental.pallas import tpu as pltpu

INV_SQRT2 = 0.7071067811865476  # 2 ** (-0.5)


def _round_up(x, m):
    return (x + m - 1) // m * m


def _make_window_regimes(n_t, tile_t, pad, seq_len):
    """Static (predicate, dst_row_offset, rows) triples describing the valid
    part of tile jj's halo window inside the unpadded [0, T) time axis.

    Requires tile_t >= pad, which guarantees:
      * only tile 0 starts before row 0 (by exactly `pad` rows), and
      * only the last two tiles can extend past row T-1.
    All row counts are Python ints, so every DMA has a static size."""
    halo_t = tile_t + 2 * pad

    def trail(jj):
        return max(0, (jj + 1) * tile_t + pad - seq_len)

    regimes = [(lambda jj: jj == 0, pad, halo_t - pad - trail(0))]
    if n_t >= 2:
        regimes.append((lambda jj: jj == n_t - 1, 0, halo_t - trail(n_t - 1)))
    if n_t >= 3:
        regimes.append((lambda jj: jj == n_t - 2, 0, halo_t - trail(n_t - 2)))
    if n_t >= 4:
        regimes.append(
            (lambda jj: jnp.logical_and(jj >= 1, jj <= n_t - 3), 0, halo_t))
    return [(p, o, s) for (p, o, s) in regimes if s > 0]


# ----------------------------------------------------------------------------
# Kernel
# ----------------------------------------------------------------------------
def _wavenet_kernel(x_hbm_ref, mel_ref, e_ref,
                    w_conv_ref, b_conv_ref, w_mel_ref, w_rs_ref, b_rs_ref,
                    out_ref,
                    xwin_ref, dma_sem,
                    *, channels, kernels, dilations, pad, tile_t, seq_len, n_t,
                    fused_taps):
    C = channels
    K = kernels
    halo_t = tile_t + 2 * pad
    b = pl.program_id(0)
    j = pl.program_id(1)
    slot = j % 2
    cd = w_conv_ref.dtype

    regimes = _make_window_regimes(n_t, tile_t, pad, seq_len)

    def window_copy(jj, s, lead, rows):
        # Only in-bounds rows of the UNPADDED input are transferred; identical
        # descriptor shapes on start/wait keep the DMA semaphore balanced.
        src0 = jj * tile_t - pad + lead
        return pltpu.make_async_copy(
            x_hbm_ref.at[b, pl.ds(src0, rows), :],
            xwin_ref.at[s, pl.ds(lead, rows), :],
            dma_sem.at[s])

    def start_fetch(jj, s):
        for pred, lead, rows in regimes:
            @pl.when(pred(jj))
            def _():
                window_copy(jj, s, lead, rows).start()

    def wait_fetch(jj, s):
        for pred, lead, rows in regimes:
            @pl.when(pred(jj))
            def _():
                window_copy(jj, s, lead, rows).wait()

    # Prime the pipeline on the first time-tile of every batch row.
    @pl.when(j == 0)
    def _():
        start_fetch(j, slot)

    # Prefetch the next tile's halo into the other slot; it completes under
    # this tile's matmuls / gating (never crosses the batch boundary, so no
    # dangling DMA at the end of a core's work).
    if n_t > 1:
        @pl.when(j + 1 < n_t)
        def _():
            start_fetch(j + 1, 1 - slot)

    # conv bias + proj_mel(mel): [tile_t, M] @ [M, 2C]; depends only on the
    # auto-pipelined mel tile, so it runs while the halo DMA is in flight.
    acc = jnp.dot(mel_ref[0], w_mel_ref[...],
                  preferred_element_type=jnp.float32)
    acc = acc + b_conv_ref[...]

    wait_fetch(j, slot)

    # Window in its native dtype: add the per-batch embed projection and zero
    # rows outside [0, T) (the conv's "same" zero padding).  No f32 round trip.
    row0 = j * tile_t - pad
    row_ids = row0 + lax.broadcasted_iota(jnp.int32, (halo_t, 1), 0)
    valid = jnp.logical_and(row_ids >= 0, row_ids < seq_len)
    xw = jnp.where(valid, xwin_ref[slot] + e_ref[0], 0)

    taps = [xw[k * dilations:k * dilations + tile_t, :] for k in range(K)]
    if fused_taps and K > 1:
        # One wide-contraction matmul [tile_t, K*C] @ [K*C, 2C] (v6e/v7x MXU).
        xcol = jnp.concatenate([t.astype(cd) for t in taps], axis=-1)
        acc = acc + jnp.dot(xcol, w_conv_ref[...],
                            preferred_element_type=jnp.float32)
    else:
        # K accumulating native-128 contractions (v5e MXU; no im2col copies).
        wc = w_conv_ref[...]
        for k in range(K):
            acc = acc + jnp.dot(taps[k].astype(cd), wc[k * C:(k + 1) * C, :],
                                preferred_element_type=jnp.float32)

    # Gated activation in f32 on the VPU/EUP.
    x2 = jax.nn.sigmoid(acc[:, :C]) * jnp.tanh(acc[:, C:])

    # Fused proj_res | proj_skip: one [tile_t, C] @ [C, 2C] matmul.
    rs = jnp.dot(x2.astype(cd), w_rs_ref[...],
                 preferred_element_type=jnp.float32) + b_rs_ref[...]

    # Two direct lane-dense stores into the packed res|skip block (no concat).
    out_ref[0, :, :C] = ((x2 + rs[:, :C]) * INV_SQRT2).astype(out_ref.dtype)
    out_ref[0, :, C:] = rs[:, C:].astype(out_ref.dtype)


# ----------------------------------------------------------------------------
# Wrappers
# ----------------------------------------------------------------------------
def wavenet_block_tc(inputs_tc, embed, mel_tc, params, *, kernels, dilations,
                     tile_t=1024, compute_dtype=jnp.bfloat16, out_dtype=None,
                     fused_taps=True):
    """Time-major WaveNet block.

    inputs_tc [B, T, C], embed [B, E], mel_tc [B, T, M]
      -> (res [B, T, C], skip [B, T, C]) in `out_dtype` (default compute_dtype).

    Prefer this entry point when stacking blocks: activations stay in [B,T,C]
    (and in bf16) so the next block's halo DMA reads them without any casts.
    tile_t: raise to ~2048 on v5e/v6e, 1024-2048 on v7x (64 MiB VMEM).
    fused_taps: True for v6e/v7x (wide K*C contraction), False for v5e.
    """
    B, T, C = inputs_tc.shape
    M = mel_tc.shape[2]
    K = kernels
    pad = (K - 1) * dilations // 2
    assert (K - 1) * dilations == 2 * pad, \
        "use odd kernel size for same-length output"
    if out_dtype is None:
        out_dtype = compute_dtype

    (w_conv, b_conv, w_embed, w_mel, w_res, b_res, w_skip, b_skip) = params

    # Time tile: multiple of 8 sublanes, >= pad (halo bookkeeping), <= padded T.
    tile_t = max(8, min(int(tile_t), _round_up(T, 8)))
    tile_t = _round_up(max(tile_t, pad), 8)
    n_t = pl.cdiv(T, tile_t)
    t_grid = n_t * tile_t
    halo_t = tile_t + 2 * pad

    # Tiny hoisted embed projection ([B,E]@[E,C]); the per-row add happens
    # in-kernel, so there is NO wrapper-side pass over the [B,T,C] activations.
    e_proj = jnp.dot(embed.astype(jnp.float32), w_embed.astype(jnp.float32))
    e_proj = e_proj.reshape(B, 1, C).astype(inputs_tc.dtype)

    # mel is small (M << C): pad/cast it to the grid-aligned extent.
    mel_p = jnp.pad(mel_tc, ((0, 0), (0, t_grid - T), (0, 0))).astype(compute_dtype)

    # Fused weights: K conv taps -> [K*C, 2C]; proj_res|proj_skip -> [C, 2C].
    w_conv_f = w_conv.reshape(K * C, 2 * C).astype(compute_dtype)
    w_mel_c = w_mel.astype(compute_dtype)
    w_rs = jnp.concatenate([w_res, w_skip], axis=1).astype(compute_dtype)
    b_rs = jnp.concatenate([b_res, b_skip], axis=1).astype(jnp.float32)
    b_conv_f = b_conv.astype(jnp.float32)

    kernel = functools.partial(
        _wavenet_kernel, channels=C, kernels=K, dilations=dilations, pad=pad,
        tile_t=tile_t, seq_len=T, n_t=n_t, fused_taps=fused_taps)

    def const_spec(shape):
        # Constant index_map: Pallas fetches the block once and reuses it.
        return pl.BlockSpec(shape, lambda b, j: (0,) * len(shape))

    # VMEM budget from the actual tile math (+2x headroom, capped for v7x).
    in_b = jnp.dtype(inputs_tc.dtype).itemsize
    cd_b = jnp.dtype(compute_dtype).itemsize
    out_b = jnp.dtype(out_dtype).itemsize
    vmem_est = (2 * halo_t * C * in_b                 # halo double buffer
                + 2 * tile_t * M * cd_b               # mel double buffer
                + 2 * tile_t * 2 * C * out_b          # out double buffer
                + tile_t * K * C * max(in_b, cd_b)    # im2col / tap temps
                + 6 * tile_t * 2 * C * 4              # acc / gate / rs f32 temps
                + (K * C + M + C + 2) * 2 * C * cd_b) # resident weights
    vmem_limit = int(min(max(2 * vmem_est, 32 << 20), 64 << 20))

    out = pl.pallas_call(
        kernel,
        out_shape=jax.ShapeDtypeStruct((B, t_grid, 2 * C), out_dtype),
        grid_spec=pltpu.PrefetchScalarGridSpec(
            num_scalar_prefetch=0,
            grid=(B, n_t),
            in_specs=[
                pl.BlockSpec(memory_space=pl.ANY),                      # x (HBM, unpadded)
                pl.BlockSpec((1, tile_t, M), lambda b, j: (b, j, 0)),   # mel tile
                pl.BlockSpec((1, 1, C), lambda b, j: (b, 0, 0)),        # embed proj [b]
                const_spec((K * C, 2 * C)),                             # w_conv (fused taps)
                const_spec((1, 2 * C)),                                 # b_conv
                const_spec((M, 2 * C)),                                 # w_mel
                const_spec((C, 2 * C)),                                 # w_res | w_skip
                const_spec((1, 2 * C)),                                 # b_res | b_skip
            ],
            out_specs=pl.BlockSpec((1, tile_t, 2 * C), lambda b, j: (b, j, 0)),
            scratch_shapes=[
                pltpu.VMEM((2, halo_t, C), inputs_tc.dtype),  # halo double buffer
                pltpu.SemaphoreType.DMA((2,)),                # one sem per slot
            ],
        ),
        compiler_params=pltpu.CompilerParams(
            # Time carries the cross-step DMA chain -> "arbitrary"; batch is
            # independent -> "parallel" (v7x megacore split lands on B).
            dimension_semantics=("parallel", "arbitrary"),
            vmem_limit_bytes=vmem_limit,
        ),
    )(inputs_tc, mel_p, e_proj, w_conv_f, b_conv_f, w_mel_c, w_rs, b_rs)

    res = out[:, :T, :C]
    skip = out[:, :T, C:]
    return res, skip


def wavenet_block(inputs, embed, mel, params, *, kernels, dilations,
                  tile_t=1024, compute_dtype=jnp.bfloat16, out_dtype=None,
                  fused_taps=True):
    """PyTorch-layout wrapper: inputs [B,C,T], embed [B,E], mel [B,M,T]."""
    res_tc, skip_tc = wavenet_block_tc(
        jnp.transpose(inputs, (0, 2, 1)), embed, jnp.transpose(mel, (0, 2, 1)),
        params, kernels=kernels, dilations=dilations, tile_t=tile_t,
        compute_dtype=compute_dtype, out_dtype=out_dtype, fused_taps=fused_taps)
    return jnp.transpose(res_tc, (0, 2, 1)), jnp.transpose(skip_tc, (0, 2, 1))


# ----------------------------------------------------------------------------
# Deterministic parameter setup (weight_norm reparametrization applied in glue)
# ----------------------------------------------------------------------------
def _weight_norm(v, g, axes):
    norm = jnp.sqrt(jnp.sum(v * v, axis=axes, keepdims=True))
    return v * (g / norm)


def init_params(key, channels, embed, mel, kernels):
    ks = jax.random.split(key, 14)
    C, E, M, K = channels, embed, mel, kernels

    w_conv_t = _weight_norm(0.1 * jax.random.normal(ks[0], (2 * C, C, K)),
                            jax.random.uniform(ks[1], (2 * C, 1, 1), minval=0.5, maxval=1.5),
                            (1, 2))
    b_conv_t = 0.1 * jax.random.normal(ks[2], (2 * C,))
    w_emb_t = _weight_norm(0.1 * jax.random.normal(ks[3], (C, E)),
                           jax.random.uniform(ks[4], (C, 1), minval=0.5, maxval=1.5),
                           (1,))
    w_mel_t = _weight_norm(0.1 * jax.random.normal(ks[5], (2 * C, M, 1)),
                           jax.random.uniform(ks[6], (2 * C, 1, 1), minval=0.5, maxval=1.5),
                           (1, 2))
    w_res_t = _weight_norm(0.1 * jax.random.normal(ks[7], (C, C, 1)),
                           jax.random.uniform(ks[8], (C, 1, 1), minval=0.5, maxval=1.5),
                           (1, 2))
    b_res_t = 0.1 * jax.random.normal(ks[9], (C,))
    w_skip_t = _weight_norm(0.1 * jax.random.normal(ks[10], (C, C, 1)),
                            jax.random.uniform(ks[11], (C, 1, 1), minval=0.5, maxval=1.5),
                            (1, 2))
    b_skip_t = 0.1 * jax.random.normal(ks[12], (C,))

    torch_layout = (w_conv_t, b_conv_t, w_emb_t, w_mel_t,
                    w_res_t, b_res_t, w_skip_t, b_skip_t)

    kernel_layout = (
        jnp.transpose(w_conv_t, (2, 1, 0)),          # [K, C, 2C]
        b_conv_t.reshape(1, 2 * C),
        w_emb_t.T,                                   # [E, C]
        w_mel_t[:, :, 0].T,                          # [M, 2C]
        w_res_t[:, :, 0].T,                          # [C, C]
        b_res_t.reshape(1, C),
        w_skip_t[:, :, 0].T,                         # [C, C]
        b_skip_t.reshape(1, C),
    )
    return torch_layout, kernel_layout


def reference(inputs, embed_v, mel_v, torch_params, *, kernels, dilations):
    """Pure-JAX reference mirroring the PyTorch forward (NCT layout)."""
    (w_conv_t, b_conv_t, w_emb_t, w_mel_t,
     w_res_t, b_res_t, w_skip_t, b_skip_t) = torch_params
    pad = (kernels - 1) * dilations // 2
    dn = ('NCH', 'OIH', 'NCH')

    x = inputs + (embed_v @ w_emb_t.T)[..., None]
    conv = lax.conv_general_dilated(x, w_conv_t, (1,), [(pad, pad)],
                                    rhs_dilation=(dilations,), dimension_numbers=dn)
    conv = conv + b_conv_t[None, :, None]
    melp = lax.conv_general_dilated(mel_v, w_mel_t, (1,), [(0, 0)], dimension_numbers=dn)
    x = conv + melp
    gate, context = jnp.split(x, 2, axis=1)
    x = jax.nn.sigmoid(gate) * jnp.tanh(context)
    res1 = lax.conv_general_dilated(x, w_res_t, (1,), [(0, 0)],
                                    dimension_numbers=dn) + b_res_t[None, :, None]
    res = (x + res1) * INV_SQRT2
    skip = lax.conv_general_dilated(x, w_skip_t, (1,), [(0, 0)],
                                    dimension_numbers=dn) + b_skip_t[None, :, None]
    return res, skip


if __name__ == "__main__":
    B, C, E, M = 2, 128, 16, 16
    KERNELS, DILATIONS = 3, 2

    key = jax.random.PRNGKey(0)
    k_in, k_emb, k_mel, k_par = jax.random.split(key, 4)
    torch_params, kernel_params = init_params(k_par, C, E, M, KERNELS)
    embed_v = jax.random.normal(k_emb, (B, E), jnp.float32)

    def run_case(T, tile_t, compute_dtype, fused_taps, tol):
        kin = jax.random.fold_in(k_in, T)
        kml = jax.random.fold_in(k_mel, T)
        inputs = jax.random.normal(kin, (B, C, T), jnp.float32)
        mel_v = jax.random.normal(kml, (B, M, T), jnp.float32)
        res_ref, skip_ref = reference(inputs, embed_v, mel_v, torch_params,
                                      kernels=KERNELS, dilations=DILATIONS)
        res, skip = wavenet_block(inputs, embed_v, mel_v, kernel_params,
                                  kernels=KERNELS, dilations=DILATIONS,
                                  tile_t=tile_t, compute_dtype=compute_dtype,
                                  fused_taps=fused_taps)
        jax.block_until_ready((res, skip))
        assert res.shape == (B, C, T) and skip.shape == (B, C, T)
        assert jnp.allclose(res.astype(jnp.float32), res_ref, atol=tol, rtol=tol), \
            f"res mismatch (T={T}, dtype={compute_dtype})"
        assert jnp.allclose(skip.astype(jnp.float32), skip_ref, atol=tol, rtol=tol), \
            f"skip mismatch (T={T}, dtype={compute_dtype})"

    # f32 structural checks: multi-tile halo stitching + last-tile masking,
    # penultimate-tile overflow, single-tile (lead+tail masked) window with
    # the v5e (unfused-tap) variant.
    run_case(T=56, tile_t=16, compute_dtype=jnp.float32, fused_taps=True, tol=1e-3)
    run_case(T=49, tile_t=16, compute_dtype=jnp.float32, fused_taps=True, tol=1e-3)
    run_case(T=24, tile_t=64, compute_dtype=jnp.float32, fused_taps=False, tol=1e-3)
    # bf16 production path (bf16 operands and bf16 output slab).
    run_case(T=56, tile_t=16, compute_dtype=jnp.bfloat16, fused_taps=True, tol=1e-1)

    print("KERNEL_OK")
</pallas_src>

<mosaic_0001>
module attributes {stable_mosaic.version = 11 : i64} {
  func.func @_wavenet_kernel(%arg0: i32, %arg1: i32, %arg2: memref<2x56x128xf32, #tpu.memory_space<any>>, %arg3: memref<1x16x16xf32, #tpu.memory_space<vmem>>, %arg4: memref<1x1x128xf32, #tpu.memory_space<vmem>>, %arg5: memref<384x256xf32, #tpu.memory_space<vmem>>, %arg6: memref<1x256xf32, #tpu.memory_space<vmem>>, %arg7: memref<16x256xf32, #tpu.memory_space<vmem>>, %arg8: memref<128x256xf32, #tpu.memory_space<vmem>>, %arg9: memref<1x256xf32, #tpu.memory_space<vmem>>, %arg10: memref<1x16x256xf32, #tpu.memory_space<vmem>>, %arg11: memref<2x20x128xf32, #tpu.memory_space<vmem>>, %arg12: memref<2x!tpu.dma_semaphore, #tpu.memory_space<semaphore_mem>>) attributes {dimension_semantics = [#tpu.dimension_semantics<parallel>, #tpu.dimension_semantics<arbitrary>], iteration_bounds = array<i64: 2, 4>, scalar_prefetch = 0 : i64, scratch_operands = 2 : i64, tpu.core_type = #tpu.core_type<tc>, window_params = [{}, {transform_indices = @transform_1, window_bounds = array<i64: 1, 16, 16>}, {transform_indices = @transform_2, window_bounds = array<i64: 1, 1, 128>}, {pipeline_mode = #tpu.pipeline_mode<synchronous>, transform_indices = @transform_3, window_bounds = array<i64: 384, 256>}, {pipeline_mode = #tpu.pipeline_mode<synchronous>, transform_indices = @transform_4, window_bounds = array<i64: 1, 256>}, {pipeline_mode = #tpu.pipeline_mode<synchronous>, transform_indices = @transform_5, window_bounds = array<i64: 16, 256>}, {pipeline_mode = #tpu.pipeline_mode<synchronous>, transform_indices = @transform_6, window_bounds = array<i64: 128, 256>}, {pipeline_mode = #tpu.pipeline_mode<synchronous>, transform_indices = @transform_7, window_bounds = array<i64: 1, 256>}, {transform_indices = @transform_8, window_bounds = array<i64: 1, 16, 256>}]} {
    %c2_i32 = arith.constant 2 : i32
    %c0_i32 = arith.constant 0 : i32
    %0 = arith.cmpi eq, %c2_i32, %c0_i32 : i32
    %c1_i32 = arith.constant 1 : i32
    %1 = arith.select %0, %c1_i32, %c2_i32 : i32
    %2 = arith.remsi %arg1, %1 : i32
    %c0_i32_0 = arith.constant 0 : i32
    %3 = arith.cmpi ne, %2, %c0_i32_0 : i32
    %c0_i32_1 = arith.constant 0 : i32
    %4 = arith.cmpi slt, %2, %c0_i32_1 : i32
    %c0_i32_2 = arith.constant 0 : i32
    %5 = arith.cmpi slt, %1, %c0_i32_2 : i32
    %6 = arith.xori %4, %5 : i1
    %7 = arith.andi %6, %3 : i1
    %8 = arith.addi %2, %1 : i32
    %9 = arith.select %7, %8, %2 : i32
    %c0_i32_3 = arith.constant 0 : i32
    %10 = arith.cmpi eq, %arg1, %c0_i32_3 : i32
    %11 = arith.extui %10 : i1 to i32
    %c0_i32_4 = arith.constant 0 : i32
    %12 = arith.cmpi ne, %11, %c0_i32_4 : i32
    scf.if %12 {
      %c0_i32_44 = arith.constant 0 : i32
      %92 = arith.cmpi eq, %arg1, %c0_i32_44 : i32
      %93 = arith.extui %92 : i1 to i32
      %c0_i32_45 = arith.constant 0 : i32
      %94 = arith.cmpi ne, %93, %c0_i32_45 : i32
      scf.if %94 {
        %c16_i32_53 = arith.constant 16 : i32
        %106 = arith.muli %arg1, %c16_i32_53 : i32
        %c2_i32_54 = arith.constant 2 : i32
        %107 = arith.subi %106, %c2_i32_54 : i32
        %c2_i32_55 = arith.constant 2 : i32
        %108 = arith.addi %107, %c2_i32_55 : i32
        %c0_i32_56 = arith.constant 0 : i32
        %109 = tpu.memref_slice %arg2[%arg0, %108, %c0_i32_56] : memref<2x56x128xf32, #tpu.memory_space<any>> -> memref<1x18x128xf32, #tpu.memory_space<any>>
        %110 = tpu.memref_squeeze %109 : memref<1x18x128xf32, #tpu.memory_space<any>> -> memref<18x128xf32, #tpu.memory_space<any>>
        %c2_i32_57 = arith.constant 2 : i32
        %c0_i32_58 = arith.constant 0 : i32
        %111 = tpu.memref_slice %arg11[%9, %c2_i32_57, %c0_i32_58] : memref<2x20x128xf32, #tpu.memory_space<vmem>> -> memref<1x18x128xf32, #tpu.memory_space<vmem>>
        %112 = tpu.memref_squeeze %111 : memref<1x18x128xf32, #tpu.memory_space<vmem>> -> memref<18x128xf32, #tpu.memory_space<vmem>>
        %113 = tpu.memref_slice %arg12[%9] : memref<2x!tpu.dma_semaphore, #tpu.memory_space<semaphore_mem>> -> memref<1x!tpu.dma_semaphore, #tpu.memory_space<semaphore_mem>>
        %114 = tpu.memref_squeeze %113 : memref<1x!tpu.dma_semaphore, #tpu.memory_space<semaphore_mem>> -> memref<!tpu.dma_semaphore, #tpu.memory_space<semaphore_mem>>
        tpu.enqueue_dma source(%110 : memref<18x128xf32, #tpu.memory_space<any>>) target(%112 : memref<18x128xf32, #tpu.memory_space<vmem>>) target_semaphore(%114 : memref<!tpu.dma_semaphore, #tpu.memory_space<semaphore_mem>>)
      } else {
      }
      %c3_i32_46 = arith.constant 3 : i32
      %95 = arith.cmpi eq, %arg1, %c3_i32_46 : i32
      %96 = arith.extui %95 : i1 to i32
      %c0_i32_47 = arith.constant 0 : i32
      %97 = arith.cmpi ne, %96, %c0_i32_47 : i32
      scf.if %97 {
        %c16_i32_53 = arith.constant 16 : i32
        %106 = arith.muli %arg1, %c16_i32_53 : i32
        %c2_i32_54 = arith.constant 2 : i32
        %107 = arith.subi %106, %c2_i32_54 : i32
        %c0_i32_55 = arith.constant 0 : i32
        %108 = arith.addi %107, %c0_i32_55 : i32
        %c0_i32_56 = arith.constant 0 : i32
        %109 = tpu.memref_slice %arg2[%arg0, %108, %c0_i32_56] : memref<2x56x128xf32, #tpu.memory_space<any>> -> memref<1x10x128xf32, #tpu.memory_space<any>>
        %110 = tpu.memref_squeeze %109 : memref<1x10x128xf32, #tpu.memory_space<any>> -> memref<10x128xf32, #tpu.memory_space<any>>
        %c0_i32_57 = arith.constant 0 : i32
        %c0_i32_58 = arith.constant 0 : i32
        %111 = tpu.memref_slice %arg11[%9, %c0_i32_57, %c0_i32_58] : memref<2x20x128xf32, #tpu.memory_space<vmem>> -> memref<1x10x128xf32, #tpu.memory_space<vmem>>
        %112 = tpu.memref_squeeze %111 : memref<1x10x128xf32, #tpu.memory_space<vmem>> -> memref<10x128xf32, #tpu.memory_space<vmem>>
        %113 = tpu.memref_slice %arg12[%9] : memref<2x!tpu.dma_semaphore, #tpu.memory_space<semaphore_mem>> -> memref<1x!tpu.dma_semaphore, #tpu.memory_space<semaphore_mem>>
        %114 = tpu.memref_squeeze %113 : memref<1x!tpu.dma_semaphore, #tpu.memory_space<semaphore_mem>> -> memref<!tpu.dma_semaphore, #tpu.memory_space<semaphore_mem>>
        tpu.enqueue_dma source(%110 : memref<10x128xf32, #tpu.memory_space<any>>) target(%112 : memref<10x128xf32, #tpu.memory_space<vmem>>) target_semaphore(%114 : memref<!tpu.dma_semaphore, #tpu.memory_space<semaphore_mem>>)
      } else {
      }
      %c2_i32_48 = arith.constant 2 : i32
      %98 = arith.cmpi eq, %arg1, %c2_i32_48 : i32
      %99 = arith.extui %98 : i1 to i32
      %c0_i32_49 = arith.constant 0 : i32
      %100 = arith.cmpi ne, %99, %c0_i32_49 : i32
      scf.if %100 {
        %c16_i32_53 = arith.constant 16 : i32
        %106 = arith.muli %arg1, %c16_i32_53 : i32
        %c2_i32_54 = arith.constant 2 : i32
        %107 = arith.subi %106, %c2_i32_54 : i32
        %c0_i32_55 = arith.constant 0 : i32
        %108 = arith.addi %107, %c0_i32_55 : i32
        %c0_i32_56 = arith.constant 0 : i32
        %109 = tpu.memref_slice %arg2[%arg0, %108, %c0_i32_56] : memref<2x56x128xf32, #tpu.memory_space<any>> -> memref<1x20x128xf32, #tpu.memory_space<any>>
        %110 = tpu.memref_squeeze %109 : memref<1x20x128xf32, #tpu.memory_space<any>> -> memref<20x128xf32, #tpu.memory_space<any>>
        %c0_i32_57 = arith.constant 0 : i32
        %c0_i32_58 = arith.constant 0 : i32
        %111 = tpu.memref_slice %arg11[%9, %c0_i32_57, %c0_i32_58] : memref<2x20x128xf32, #tpu.memory_space<vmem>> -> memref<1x20x128xf32, #tpu.memory_space<vmem>>
        %112 = tpu.memref_squeeze %111 : memref<1x20x128xf32, #tpu.memory_space<vmem>> -> memref<20x128xf32, #tpu.memory_space<vmem>>
        %113 = tpu.memref_slice %arg12[%9] : memref<2x!tpu.dma_semaphore, #tpu.memory_space<semaphore_mem>> -> memref<1x!tpu.dma_semaphore, #tpu.memory_space<semaphore_mem>>
        %114 = tpu.memref_squeeze %113 : memref<1x!tpu.dma_semaphore, #tpu.memory_space<semaphore_mem>> -> memref<!tpu.dma_semaphore, #tpu.memory_space<semaphore_mem>>
        tpu.enqueue_dma source(%110 : memref<20x128xf32, #tpu.memory_space<any>>) target(%112 : memref<20x128xf32, #tpu.memory_space<vmem>>) target_semaphore(%114 : memref<!tpu.dma_semaphore, #tpu.memory_space<semaphore_mem>>)
      } else {
      }
      %c1_i32_50 = arith.constant 1 : i32
      %101 = arith.cmpi sge, %arg1, %c1_i32_50 : i32
      %c1_i32_51 = arith.constant 1 : i32
      %102 = arith.cmpi sle, %arg1, %c1_i32_51 : i32
      %103 = arith.andi %101, %102 : i1
      %104 = arith.extui %103 : i1 to i32
      %c0_i32_52 = arith.constant 0 : i32
      %105 = arith.cmpi ne, %104, %c0_i32_52 : i32
      scf.if %105 {
        %c16_i32_53 = arith.constant 16 : i32
        %106 = arith.muli %arg1, %c16_i32_53 : i32
        %c2_i32_54 = arith.constant 2 : i32
        %107 = arith.subi %106, %c2_i32_54 : i32
        %c0_i32_55 = arith.constant 0 : i32
        %108 = arith.addi %107, %c0_i32_55 : i32
        %c0_i32_56 = arith.constant 0 : i32
        %109 = tpu.memref_slice %arg2[%arg0, %108, %c0_i32_56] : memref<2x56x128xf32, #tpu.memory_space<any>> -> memref<1x20x128xf32, #tpu.memory_space<any>>
        %110 = tpu.memref_squeeze %109 : memref<1x20x128xf32, #tpu.memory_space<any>> -> memref<20x128xf32, #tpu.memory_space<any>>
        %c0_i32_57 = arith.constant 0 : i32
        %c0_i32_58 = arith.constant 0 : i32
        %111 = tpu.memref_slice %arg11[%9, %c0_i32_57, %c0_i32_58] : memref<2x20x128xf32, #tpu.memory_space<vmem>> -> memref<1x20x128xf32, #tpu.memory_space<vmem>>
        %112 = tpu.memref_squeeze %111 : memref<1x20x128xf32, #tpu.memory_space<vmem>> -> memref<20x128xf32, #tpu.memory_space<vmem>>
        %113 = tpu.memref_slice %arg12[%9] : memref<2x!tpu.dma_semaphore, #tpu.memory_space<semaphore_mem>> -> memref<1x!tpu.dma_semaphore, #tpu.memory_space<semaphore_mem>>
        %114 = tpu.memref_squeeze %113 : memref<1x!tpu.dma_semaphore, #tpu.memory_space<semaphore_mem>> -> memref<!tpu.dma_semaphore, #tpu.memory_space<semaphore_mem>>
        tpu.enqueue_dma source(%110 : memref<20x128xf32, #tpu.memory_space<any>>) target(%112 : memref<20x128xf32, #tpu.memory_space<vmem>>) target_semaphore(%114 : memref<!tpu.dma_semaphore, #tpu.memory_space<semaphore_mem>>)
      } else {
      }
    } else {
    }
    %c1_i32_5 = arith.constant 1 : i32
    %13 = arith.addi %arg1, %c1_i32_5 : i32
    %c4_i32 = arith.constant 4 : i32
    %14 = arith.cmpi slt, %13, %c4_i32 : i32
    %15 = arith.extui %14 : i1 to i32
    %c0_i32_6 = arith.constant 0 : i32
    %16 = arith.cmpi ne, %15, %c0_i32_6 : i32
    scf.if %16 {
      %c1_i32_44 = arith.constant 1 : i32
      %92 = arith.addi %arg1, %c1_i32_44 : i32
      %c1_i32_45 = arith.constant 1 : i32
      %93 = arith.subi %c1_i32_45, %9 : i32
      %c0_i32_46 = arith.constant 0 : i32
      %94 = arith.cmpi eq, %92, %c0_i32_46 : i32
      %95 = arith.extui %94 : i1 to i32
      %c0_i32_47 = arith.constant 0 : i32
      %96 = arith.cmpi ne, %95, %c0_i32_47 : i32
      scf.if %96 {
        %c16_i32_55 = arith.constant 16 : i32
        %108 = arith.muli %92, %c16_i32_55 : i32
        %c2_i32_56 = arith.constant 2 : i32
        %109 = arith.subi %108, %c2_i32_56 : i32
        %c2_i32_57 = arith.constant 2 : i32
        %110 = arith.addi %109, %c2_i32_57 : i32
        %c0_i32_58 = arith.constant 0 : i32
        %111 = tpu.memref_slice %arg2[%arg0, %110, %c0_i32_58] : memref<2x56x128xf32, #tpu.memory_space<any>> -> memref<1x18x128xf32, #tpu.memory_space<any>>
        %112 = tpu.memref_squeeze %111 : memref<1x18x128xf32, #tpu.memory_space<any>> -> memref<18x128xf32, #tpu.memory_space<any>>
        %c2_i32_59 = arith.constant 2 : i32
        %c0_i32_60 = arith.constant 0 : i32
        %113 = tpu.memref_slice %arg11[%93, %c2_i32_59, %c0_i32_60] : memref<2x20x128xf32, #tpu.memory_space<vmem>> -> memref<1x18x128xf32, #tpu.memory_space<vmem>>
        %114 = tpu.memref_squeeze %113 : memref<1x18x128xf32, #tpu.memory_space<vmem>> -> memref<18x128xf32, #tpu.memory_space<vmem>>
        %115 = tpu.memref_slice %arg12[%93] : memref<2x!tpu.dma_semaphore, #tpu.memory_space<semaphore_mem>> -> memref<1x!tpu.dma_semaphore, #tpu.memory_space<semaphore_mem>>
        %116 = tpu.memref_squeeze %115 : memref<1x!tpu.dma_semaphore, #tpu.memory_space<semaphore_mem>> -> memref<!tpu.dma_semaphore, #tpu.memory_space<semaphore_mem>>
        tpu.enqueue_dma source(%112 : memref<18x128xf32, #tpu.memory_space<any>>) target(%114 : memref<18x128xf32, #tpu.memory_space<vmem>>) target_semaphore(%116 : memref<!tpu.dma_semaphore, #tpu.memory_space<semaphore_mem>>)
      } else {
      }
      %c3_i32_48 = arith.constant 3 : i32
      %97 = arith.cmpi eq, %92, %c3_i32_48 : i32
      %98 = arith.extui %97 : i1 to i32
      %c0_i32_49 = arith.constant 0 : i32
      %99 = arith.cmpi ne, %98, %c0_i32_49 : i32
      scf.if %99 {
        %c16_i32_55 = arith.constant 16 : i32
        %108 = arith.muli %92, %c16_i32_55 : i32
        %c2_i32_56 = arith.constant 2 : i32
        %109 = arith.subi %108, %c2_i32_56 : i32
        %c0_i32_57 = arith.constant 0 : i32
        %110 = arith.addi %109, %c0_i32_57 : i32
        %c0_i32_58 = arith.constant 0 : i32
        %111 = tpu.memref_slice %arg2[%arg0, %110, %c0_i32_58] : memref<2x56x128xf32, #tpu.memory_space<any>> -> memref<1x10x128xf32, #tpu.memory_space<any>>
        %112 = tpu.memref_squeeze %111 : memref<1x10x128xf32, #tpu.memory_space<any>> -> memref<10x128xf32, #tpu.memory_space<any>>
        %c0_i32_59 = arith.constant 0 : i32
        %c0_i32_60 = arith.constant 0 : i32
        %113 = tpu.memref_slice %arg11[%93, %c0_i32_59, %c0_i32_60] : memref<2x20x128xf32, #tpu.memory_space<vmem>> -> memref<1x10x128xf32, #tpu.memory_space<vmem>>
        %114 = tpu.memref_squeeze %113 : memref<1x10x128xf32, #tpu.memory_space<vmem>> -> memref<10x128xf32, #tpu.memory_space<vmem>>
        %115 = tpu.memref_slice %arg12[%93] : memref<2x!tpu.dma_semaphore, #tpu.memory_space<semaphore_mem>> -> memref<1x!tpu.dma_semaphore, #tpu.memory_space<semaphore_mem>>
        %116 = tpu.memref_squeeze %115 : memref<1x!tpu.dma_semaphore, #tpu.memory_space<semaphore_mem>> -> memref<!tpu.dma_semaphore, #tpu.memory_space<semaphore_mem>>
        tpu.enqueue_dma source(%112 : memref<10x128xf32, #tpu.memory_space<any>>) target(%114 : memref<10x128xf32, #tpu.memory_space<vmem>>) target_semaphore(%116 : memref<!tpu.dma_semaphore, #tpu.memory_space<semaphore_mem>>)
      } else {
      }
      %c2_i32_50 = arith.constant 2 : i32
      %100 = arith.cmpi eq, %92, %c2_i32_50 : i32
      %101 = arith.extui %100 : i1 to i32
      %c0_i32_51 = arith.constant 0 : i32
      %102 = arith.cmpi ne, %101, %c0_i32_51 : i32
      scf.if %102 {
        %c16_i32_55 = arith.constant 16 : i32
        %108 = arith.muli %92, %c16_i32_55 : i32
        %c2_i32_56 = arith.constant 2 : i32
        %109 = arith.subi %108, %c2_i32_56 : i32
        %c0_i32_57 = arith.constant 0 : i32
        %110 = arith.addi %109, %c0_i32_57 : i32
        %c0_i32_58 = arith.constant 0 : i32
        %111 = tpu.memref_slice %arg2[%arg0, %110, %c0_i32_58] : memref<2x56x128xf32, #tpu.memory_space<any>> -> memref<1x20x128xf32, #tpu.memory_space<any>>
        %112 = tpu.memref_squeeze %111 : memref<1x20x128xf32, #tpu.memory_space<any>> -> memref<20x128xf32, #tpu.memory_space<any>>
        %c0_i32_59 = arith.constant 0 : i32
        %c0_i32_60 = arith.constant 0 : i32
        %113 = tpu.memref_slice %arg11[%93, %c0_i32_59, %c0_i32_60] : memref<2x20x128xf32, #tpu.memory_space<vmem>> -> memref<1x20x128xf32, #tpu.memory_space<vmem>>
        %114 = tpu.memref_squeeze %113 : memref<1x20x128xf32, #tpu.memory_space<vmem>> -> memref<20x128xf32, #tpu.memory_space<vmem>>
        %115 = tpu.memref_slice %arg12[%93] : memref<2x!tpu.dma_semaphore, #tpu.memory_space<semaphore_mem>> -> memref<1x!tpu.dma_semaphore, #tpu.memory_space<semaphore_mem>>
        %116 = tpu.memref_squeeze %115 : memref<1x!tpu.dma_semaphore, #tpu.memory_space<semaphore_mem>> -> memref<!tpu.dma_semaphore, #tpu.memory_space<semaphore_mem>>
        tpu.enqueue_dma source(%112 : memref<20x128xf32, #tpu.memory_space<any>>) target(%114 : memref<20x128xf32, #tpu.memory_space<vmem>>) target_semaphore(%116 : memref<!tpu.dma_semaphore, #tpu.memory_space<semaphore_mem>>)
      } else {
      }
      %c1_i32_52 = arith.constant 1 : i32
      %103 = arith.cmpi sge, %92, %c1_i32_52 : i32
      %c1_i32_53 = arith.constant 1 : i32
      %104 = arith.cmpi sle, %92, %c1_i32_53 : i32
      %105 = arith.andi %103, %104 : i1
      %106 = arith.extui %105 : i1 to i32
      %c0_i32_54 = arith.constant 0 : i32
      %107 = arith.cmpi ne, %106, %c0_i32_54 : i32
      scf.if %107 {
        %c16_i32_55 = arith.constant 16 : i32
        %108 = arith.muli %92, %c16_i32_55 : i32
        %c2_i32_56 = arith.constant 2 : i32
        %109 = arith.subi %108, %c2_i32_56 : i32
        %c0_i32_57 = arith.constant 0 : i32
        %110 = arith.addi %109, %c0_i32_57 : i32
        %c0_i32_58 = arith.constant 0 : i32
        %111 = tpu.memref_slice %arg2[%arg0, %110, %c0_i32_58] : memref<2x56x128xf32, #tpu.memory_space<any>> -> memref<1x20x128xf32, #tpu.memory_space<any>>
        %112 = tpu.memref_squeeze %111 : memref<1x20x128xf32, #tpu.memory_space<any>> -> memref<20x128xf32, #tpu.memory_space<any>>
        %c0_i32_59 = arith.constant 0 : i32
        %c0_i32_60 = arith.constant 0 : i32
        %113 = tpu.memref_slice %arg11[%93, %c0_i32_59, %c0_i32_60] : memref<2x20x128xf32, #tpu.memory_space<vmem>> -> memref<1x20x128xf32, #tpu.memory_space<vmem>>
        %114 = tpu.memref_squeeze %113 : memref<1x20x128xf32, #tpu.memory_space<vmem>> -> memref<20x128xf32, #tpu.memory_space<vmem>>
        %115 = tpu.memref_slice %arg12[%93] : memref<2x!tpu.dma_semaphore, #tpu.memory_space<semaphore_mem>> -> memref<1x!tpu.dma_semaphore, #tpu.memory_space<semaphore_mem>>
        %116 = tpu.memref_squeeze %115 : memref<1x!tpu.dma_semaphore, #tpu.memory_space<semaphore_mem>> -> memref<!tpu.dma_semaphore, #tpu.memory_space<semaphore_mem>>
        tpu.enqueue_dma source(%112 : memref<20x128xf32, #tpu.memory_space<any>>) target(%114 : memref<20x128xf32, #tpu.memory_space<vmem>>) target_semaphore(%116 : memref<!tpu.dma_semaphore, #tpu.memory_space<semaphore_mem>>)
      } else {
      }
    } else {
    }
    %c0 = arith.constant 0 : index
    %c0_7 = arith.constant 0 : index
    %c0_8 = arith.constant 0 : index
    %17 = vector.load %arg3[%c0, %c0_7, %c0_8] : memref<1x16x16xf32, #tpu.memory_space<vmem>>, vector<1x16x16xf32>
    %18 = vector.shape_cast %17 : vector<1x16x16xf32> to vector<16x16xf32>
    %c0_9 = arith.constant 0 : index
    %c0_10 = arith.constant 0 : index
    %19 = vector.load %arg7[%c0_9, %c0_10] : memref<16x256xf32, #tpu.memory_space<vmem>>, vector<16x256xf32>
    %cst = arith.constant dense<0.000000e+00> : vector<16x256xf32>
    %20 = tpu.matmul %18, %19, %cst {dimension_numbers = #tpu.dot_dimension_numbers<[1], [0], [0], [1], [0, 0, 1, 1], [], []>} : vector<16x16xf32>, vector<16x256xf32>, vector<16x256xf32> -> vector<16x256xf32>
    %c0_11 = arith.constant 0 : index
    %c0_12 = arith.constant 0 : index
    %21 = vector.load %arg6[%c0_11, %c0_12] : memref<1x256xf32, #tpu.memory_space<vmem>>, vector<1x256xf32>
    %22 = vector.broadcast %21 : vector<1x256xf32> to vector<16x256xf32>
    %23 = arith.addf %20, %22 : vector<16x256xf32>
    %c0_i32_13 = arith.constant 0 : i32
    %24 = arith.cmpi eq, %arg1, %c0_i32_13 : i32
    %25 = arith.extui %24 : i1 to i32
    %c0_i32_14 = arith.constant 0 : i32
    %26 = arith.cmpi ne, %25, %c0_i32_14 : i32
    scf.if %26 {
      %c16_i32_44 = arith.constant 16 : i32
      %92 = arith.muli %arg1, %c16_i32_44 : i32
      %c2_i32_45 = arith.constant 2 : i32
      %93 = arith.subi %92, %c2_i32_45 : i32
      %c2_i32_46 = arith.constant 2 : i32
      %94 = arith.addi %93, %c2_i32_46 : i32
      %c0_i32_47 = arith.constant 0 : i32
      %95 = tpu.memref_slice %arg2[%arg0, %94, %c0_i32_47] : memref<2x56x128xf32, #tpu.memory_space<any>> -> memref<1x18x128xf32, #tpu.memory_space<any>>
      %96 = tpu.memref_squeeze %95 : memref<1x18x128xf32, #tpu.memory_space<any>> -> memref<18x128xf32, #tpu.memory_space<any>>
      %c2_i32_48 = arith.constant 2 : i32
      %c0_i32_49 = arith.constant 0 : i32
      %97 = tpu.memref_slice %arg11[%9, %c2_i32_48, %c0_i32_49] : memref<2x20x128xf32, #tpu.memory_space<vmem>> -> memref<1x18x128xf32, #tpu.memory_space<vmem>>
      %98 = tpu.memref_squeeze %97 : memref<1x18x128xf32, #tpu.memory_space<vmem>> -> memref<18x128xf32, #tpu.memory_space<vmem>>
      %99 = tpu.memref_slice %arg12[%9] : memref<2x!tpu.dma_semaphore, #tpu.memory_space<semaphore_mem>> -> memref<1x!tpu.dma_semaphore, #tpu.memory_space<semaphore_mem>>
      %100 = tpu.memref_squeeze %99 : memref<1x!tpu.dma_semaphore, #tpu.memory_space<semaphore_mem>> -> memref<!tpu.dma_semaphore, #tpu.memory_space<semaphore_mem>>
      tpu.wait_dma2 semaphore(%100 : memref<!tpu.dma_semaphore, #tpu.memory_space<semaphore_mem>>) src(%96 : memref<18x128xf32, #tpu.memory_space<any>>) dst(%98 : memref<18x128xf32, #tpu.memory_space<vmem>>)
    } else {
    }
    %c3_i32 = arith.constant 3 : i32
    %27 = arith.cmpi eq, %arg1, %c3_i32 : i32
    %28 = arith.extui %27 : i1 to i32
    %c0_i32_15 = arith.constant 0 : i32
    %29 = arith.cmpi ne, %28, %c0_i32_15 : i32
    scf.if %29 {
      %c16_i32_44 = arith.constant 16 : i32
      %92 = arith.muli %arg1, %c16_i32_44 : i32
      %c2_i32_45 = arith.constant 2 : i32
      %93 = arith.subi %92, %c2_i32_45 : i32
      %c0_i32_46 = arith.constant 0 : i32
      %94 = arith.addi %93, %c0_i32_46 : i32
      %c0_i32_47 = arith.constant 0 : i32
      %95 = tpu.memref_slice %arg2[%arg0, %94, %c0_i32_47] : memref<2x56x128xf32, #tpu.memory_space<any>> -> memref<1x10x128xf32, #tpu.memory_space<any>>
      %96 = tpu.memref_squeeze %95 : memref<1x10x128xf32, #tpu.memory_space<any>> -> memref<10x128xf32, #tpu.memory_space<any>>
      %c0_i32_48 = arith.constant 0 : i32
      %c0_i32_49 = arith.constant 0 : i32
      %97 = tpu.memref_slice %arg11[%9, %c0_i32_48, %c0_i32_49] : memref<2x20x128xf32, #tpu.memory_space<vmem>> -> memref<1x10x128xf32, #tpu.memory_space<vmem>>
      %98 = tpu.memref_squeeze %97 : memref<1x10x128xf32, #tpu.memory_space<vmem>> -> memref<10x128xf32, #tpu.memory_space<vmem>>
      %99 = tpu.memref_slice %arg12[%9] : memref<2x!tpu.dma_semaphore, #tpu.memory_space<semaphore_mem>> -> memref<1x!tpu.dma_semaphore, #tpu.memory_space<semaphore_mem>>
      %100 = tpu.memref_squeeze %99 : memref<1x!tpu.dma_semaphore, #tpu.memory_space<semaphore_mem>> -> memref<!tpu.dma_semaphore, #tpu.memory_space<semaphore_mem>>
      tpu.wait_dma2 semaphore(%100 : memref<!tpu.dma_semaphore, #tpu.memory_space<semaphore_mem>>) src(%96 : memref<10x128xf32, #tpu.memory_space<any>>) dst(%98 : memref<10x128xf32, #tpu.memory_space<vmem>>)
    } else {
    }
    %c2_i32_16 = arith.constant 2 : i32
    %30 = arith.cmpi eq, %arg1, %c2_i32_16 : i32
    %31 = arith.extui %30 : i1 to i32
    %c0_i32_17 = arith.constant 0 : i32
    %32 = arith.cmpi ne, %31, %c0_i32_17 : i32
    scf.if %32 {
      %c16_i32_44 = arith.constant 16 : i32
      %92 = arith.muli %arg1, %c16_i32_44 : i32
      %c2_i32_45 = arith.constant 2 : i32
      %93 = arith.subi %92, %c2_i32_45 : i32
      %c0_i32_46 = arith.constant 0 : i32
      %94 = arith.addi %93, %c0_i32_46 : i32
      %c0_i32_47 = arith.constant 0 : i32
      %95 = tpu.memref_slice %arg2[%arg0, %94, %c0_i32_47] : memref<2x56x128xf32, #tpu.memory_space<any>> -> memref<1x20x128xf32, #tpu.memory_space<any>>
      %96 = tpu.memref_squeeze %95 : memref<1x20x128xf32, #tpu.memory_space<any>> -> memref<20x128xf32, #tpu.memory_space<any>>
      %c0_i32_48 = arith.constant 0 : i32
      %c0_i32_49 = arith.constant 0 : i32
      %97 = tpu.memref_slice %arg11[%9, %c0_i32_48, %c0_i32_49] : memref<2x20x128xf32, #tpu.memory_space<vmem>> -> memref<1x20x128xf32, #tpu.memory_space<vmem>>
      %98 = tpu.memref_squeeze %97 : memref<1x20x128xf32, #tpu.memory_space<vmem>> -> memref<20x128xf32, #tpu.memory_space<vmem>>
      %99 = tpu.memref_slice %arg12[%9] : memref<2x!tpu.dma_semaphore, #tpu.memory_space<semaphore_mem>> -> memref<1x!tpu.dma_semaphore, #tpu.memory_space<semaphore_mem>>
      %100 = tpu.memref_squeeze %99 : memref<1x!tpu.dma_semaphore, #tpu.memory_space<semaphore_mem>> -> memref<!tpu.dma_semaphore, #tpu.memory_space<semaphore_mem>>
      tpu.wait_dma2 semaphore(%100 : memref<!tpu.dma_semaphore, #tpu.memory_space<semaphore_mem>>) src(%96 : memref<20x128xf32, #tpu.memory_space<any>>) dst(%98 : memref<20x128xf32, #tpu.memory_space<vmem>>)
    } else {
    }
    %c1_i32_18 = arith.constant 1 : i32
    %33 = arith.cmpi sge, %arg1, %c1_i32_18 : i32
    %c1_i32_19 = arith.constant 1 : i32
    %34 = arith.cmpi sle, %arg1, %c1_i32_19 : i32
    %35 = arith.andi %33, %34 : i1
    %36 = arith.extui %35 : i1 to i32
    %c0_i32_20 = arith.constant 0 : i32
    %37 = arith.cmpi ne, %36, %c0_i32_20 : i32
    scf.if %37 {
      %c16_i32_44 = arith.constant 16 : i32
      %92 = arith.muli %arg1, %c16_i32_44 : i32
      %c2_i32_45 = arith.constant 2 : i32
      %93 = arith.subi %92, %c2_i32_45 : i32
      %c0_i32_46 = arith.constant 0 : i32
      %94 = arith.addi %93, %c0_i32_46 : i32
      %c0_i32_47 = arith.constant 0 : i32
      %95 = tpu.memref_slice %arg2[%arg0, %94, %c0_i32_47] : memref<2x56x128xf32, #tpu.memory_space<any>> -> memref<1x20x128xf32, #tpu.memory_space<any>>
      %96 = tpu.memref_squeeze %95 : memref<1x20x128xf32, #tpu.memory_space<any>> -> memref<20x128xf32, #tpu.memory_space<any>>
      %c0_i32_48 = arith.constant 0 : i32
      %c0_i32_49 = arith.constant 0 : i32
      %97 = tpu.memref_slice %arg11[%9, %c0_i32_48, %c0_i32_49] : memref<2x20x128xf32, #tpu.memory_space<vmem>> -> memref<1x20x128xf32, #tpu.memory_space<vmem>>
      %98 = tpu.memref_squeeze %97 : memref<1x20x128xf32, #tpu.memory_space<vmem>> -> memref<20x128xf32, #tpu.memory_space<vmem>>
      %99 = tpu.memref_slice %arg12[%9] : memref<2x!tpu.dma_semaphore, #tpu.memory_space<semaphore_mem>> -> memref<1x!tpu.dma_semaphore, #tpu.memory_space<semaphore_mem>>
      %100 = tpu.memref_squeeze %99 : memref<1x!tpu.dma_semaphore, #tpu.memory_space<semaphore_mem>> -> memref<!tpu.dma_semaphore, #tpu.memory_space<semaphore_mem>>
      tpu.wait_dma2 semaphore(%100 : memref<!tpu.dma_semaphore, #tpu.memory_space<semaphore_mem>>) src(%96 : memref<20x128xf32, #tpu.memory_space<any>>) dst(%98 : memref<20x128xf32, #tpu.memory_space<vmem>>)
    } else {
    }
    %c16_i32 = arith.constant 16 : i32
    %38 = arith.muli %arg1, %c16_i32 : i32
    %c2_i32_21 = arith.constant 2 : i32
    %39 = arith.subi %38, %c2_i32_21 : i32
    %40 = tpu.iota {dimensions = array<i32: 0>} : vector<20x1xi32>
    %41 = vector.broadcast %39 : i32 to vector<20x1xi32>
    %42 = arith.addi %41, %40 : vector<20x1xi32>
    %c0_i32_22 = arith.constant 0 : i32
    %43 = vector.broadcast %c0_i32_22 : i32 to vector<20x1xi32>
    %44 = arith.cmpi sge, %42, %43 : vector<20x1xi32>
    %c56_i32 = arith.constant 56 : i32
    %45 = vector.broadcast %c56_i32 : i32 to vector<20x1xi32>
    %46 = arith.cmpi slt, %42, %45 : vector<20x1xi32>
    %47 = arith.andi %44, %46 : vector<20x1xi1>
    %48 = arith.index_cast %9 : i32 to index
    %c0_23 = arith.constant 0 : index
    %c0_24 = arith.constant 0 : index
    %49 = vector.load %arg11[%48, %c0_23, %c0_24] : memref<2x20x128xf32, #tpu.memory_space<vmem>>, vector<1x20x128xf32>
    %50 = vector.shape_cast %49 : vector<1x20x128xf32> to vector<20x128xf32>
    %c0_25 = arith.constant 0 : index
    %c0_26 = arith.constant 0 : index
    %c0_27 = arith.constant 0 : index
    %51 = vector.load %arg4[%c0_25, %c0_26, %c0_27] : memref<1x1x128xf32, #tpu.memory_space<vmem>>, vector<1x1x128xf32>
    %52 = vector.shape_cast %51 : vector<1x1x128xf32> to vector<1x128xf32>
    %53 = vector.broadcast %52 : vector<1x128xf32> to vector<20x128xf32>
    %54 = arith.addf %50, %53 : vector<20x128xf32>
    %c0_i32_28 = arith.constant 0 : i32
    %55 = arith.sitofp %c0_i32_28 : i32 to f32
    %56 = vector.shape_cast %47 : vector<20x1xi1> to vector<20x1xi1>
    %57 = vector.broadcast %56 : vector<20x1xi1> to vector<20x128xi1>
    %58 = vector.broadcast %55 : f32 to vector<20x128xf32>
    %59 = arith.select %57, %54, %58 : vector<20x128xi1>, vector<20x128xf32>
    %60 = vector.extract_strided_slice %59 {offsets = [0, 0], sizes = [16, 128], strides = [1, 1]} : vector<20x128xf32> to vector<16x128xf32>
    %61 = vector.extract_strided_slice %59 {offsets = [2, 0], sizes = [16, 128], strides = [1, 1]} : vector<20x128xf32> to vector<16x128xf32>
    %62 = vector.extract_strided_slice %59 {offsets = [4, 0], sizes = [16, 128], strides = [1, 1]} : vector<20x128xf32> to vector<16x128xf32>
    %63 = tpu.concatenate %60, %61, %62 in 1 : vector<16x128xf32>, vector<16x128xf32>, vector<16x128xf32> -> vector<16x384xf32>
    %c0_29 = arith.constant 0 : index
    %c0_30 = arith.constant 0 : index
    %64 = vector.load %arg5[%c0_29, %c0_30] : memref<384x256xf32, #tpu.memory_space<vmem>>, vector<384x256xf32>
    %cst_31 = arith.constant dense<0.000000e+00> : vector<16x256xf32>
    %65 = tpu.matmul %63, %64, %cst_31 {dimension_numbers = #tpu.dot_dimension_numbers<[1], [0], [0], [1], [0, 0, 1, 1], [], []>} : vector<16x384xf32>, vector<384x256xf32>, vector<16x256xf32> -> vector<16x256xf32>
    %66 = arith.addf %23, %65 : vector<16x256xf32>
    %67 = vector.extract_strided_slice %66 {offsets = [0, 0], sizes = [16, 128], strides = [1, 1]} : vector<16x256xf32> to vector<16x128xf32>
    %68 = arith.negf %67 : vector<16x128xf32>
    %69 = math.exp %68 : vector<16x128xf32>
    %cst_32 = arith.constant 1.000000e+00 : f32
    %70 = vector.broadcast %cst_32 : f32 to vector<16x128xf32>
    %71 = arith.addf %70, %69 : vector<16x128xf32>
    %72 = arith.divf %70, %71 : vector<16x128xf32>
    %73 = vector.extract_strided_slice %66 {offsets = [0, 128], sizes = [16, 128], strides = [1, 1]} : vector<16x256xf32> to vector<16x128xf32>
    %74 = math.tanh %73 : vector<16x128xf32>
    %75 = arith.mulf %72, %74 : vector<16x128xf32>
    %c0_33 = arith.constant 0 : index
    %c0_34 = arith.constant 0 : index
    %76 = vector.load %arg8[%c0_33, %c0_34] : memref<128x256xf32, #tpu.memory_space<vmem>>, vector<128x256xf32>
    %cst_35 = arith.constant dense<0.000000e+00> : vector<16x256xf32>
    %77 = tpu.matmul %75, %76, %cst_35 {dimension_numbers = #tpu.dot_dimension_numbers<[1], [0], [0], [1], [0, 0, 1, 1], [], []>} : vector<16x128xf32>, vector<128x256xf32>, vector<16x256xf32> -> vector<16x256xf32>
    %c0_36 = arith.constant 0 : index
    %c0_37 = arith.constant 0 : index
    %78 = vector.load %arg9[%c0_36, %c0_37] : memref<1x256xf32, #tpu.memory_space<vmem>>, vector<1x256xf32>
    %79 = vector.broadcast %78 : vector<1x256xf32> to vector<16x256xf32>
    %80 = arith.addf %77, %79 : vector<16x256xf32>
    %81 = vector.extract_strided_slice %80 {offsets = [0, 0], sizes = [16, 128], strides = [1, 1]} : vector<16x256xf32> to vector<16x128xf32>
    %82 = arith.addf %75, %81 : vector<16x128xf32>
    %cst_38 = arith.constant 0.707106769 : f32
    %83 = vector.broadcast %cst_38 : f32 to vector<16x128xf32>
    %84 = arith.mulf %82, %83 : vector<16x128xf32>
    %c0_39 = arith.constant 0 : index
    %c0_40 = arith.constant 0 : index
    %c0_41 = arith.constant 0 : index
    %85 = vector.load %arg10[%c0_39, %c0_40, %c0_41] : memref<1x16x256xf32, #tpu.memory_space<vmem>>, vector<1x16x128xf32>
    %86 = vector.shape_cast %85 : vector<1x16x128xf32> to vector<16x128xf32>
    %87 = vector.shape_cast %84 : vector<16x128xf32> to vector<1x16x128xf32>
    tpu.vector_store %arg10[%c0_39, %c0_40, %c0_41], %87 {strides = array<i32>} : memref<1x16x256xf32, #tpu.memory_space<vmem>>, vector<1x16x128xf32>,
    %88 = vector.extract_strided_slice %80 {offsets = [0, 128], sizes = [16, 128], strides = [1, 1]} : vector<16x256xf32> to vector<16x128xf32>
    %c0_42 = arith.constant 0 : index
    %c0_43 = arith.constant 0 : index
    %c128 = arith.constant 128 : index
    %89 = vector.load %arg10[%c0_42, %c0_43, %c128] : memref<1x16x256xf32, #tpu.memory_space<vmem>>, vector<1x16x128xf32>
    %90 = vector.shape_cast %89 : vector<1x16x128xf32> to vector<16x128xf32>
    %91 = vector.shape_cast %88 : vector<16x128xf32> to vector<1x16x128xf32>
    tpu.vector_store %arg10[%c0_42, %c0_43, %c128], %91 {strides = array<i32>} : memref<1x16x256xf32, #tpu.memory_space<vmem>>, vector<1x16x128xf32>,
    return
  }
  func.func @transform_1(%arg0: i32, %arg1: i32) -> (i32, i32, i32) {
    %c0_i32 = arith.constant 0 : i32
    %c0_i32_0 = arith.constant 0 : i32
    return %arg0, %arg1, %c0_i32 : i32, i32, i32
  }
  func.func @transform_2(%arg0: i32, %arg1: i32) -> (i32, i32, i32) {
    %c0_i32 = arith.constant 0 : i32
    %c0_i32_0 = arith.constant 0 : i32
    %c0_i32_1 = arith.constant 0 : i32
    return %arg0, %c0_i32, %c0_i32_0 : i32, i32, i32
  }
  func.func @transform_3(%arg0: i32, %arg1: i32) -> (i32, i32) {
    %c0_i32 = arith.constant 0 : i32
    %c0_i32_0 = arith.constant 0 : i32
    %c0_i32_1 = arith.constant 0 : i32
    return %c0_i32, %c0_i32_0 : i32, i32
  }
  func.func @transform_4(%arg0: i32, %arg1: i32) -> (i32, i32) {
    %c0_i32 = arith.constant 0 : i32
    %c0_i32_0 = arith.constant 0 : i32
    %c0_i32_1 = arith.constant 0 : i32
    return %c0_i32, %c0_i32_0 : i32, i32
  }
  func.func @transform_5(%arg0: i32, %arg1: i32) -> (i32, i32) {
    %c0_i32 = arith.constant 0 : i32
    %c0_i32_0 = arith.constant 0 : i32
    %c0_i32_1 = arith.constant 0 : i32
    return %c0_i32, %c0_i32_0 : i32, i32
  }
  func.func @transform_6(%arg0: i32, %arg1: i32) -> (i32, i32) {
    %c0_i32 = arith.constant 0 : i32
    %c0_i32_0 = arith.constant 0 : i32
    %c0_i32_1 = arith.constant 0 : i32
    return %c0_i32, %c0_i32_0 : i32, i32
  }
  func.func @transform_7(%arg0: i32, %arg1: i32) -> (i32, i32) {
    %c0_i32 = arith.constant 0 : i32
    %c0_i32_0 = arith.constant 0 : i32
    %c0_i32_1 = arith.constant 0 : i32
    return %c0_i32, %c0_i32_0 : i32, i32
  }
  func.func @transform_8(%arg0: i32, %arg1: i32) -> (i32, i32, i32) {
    %c0_i32 = arith.constant 0 : i32
    %c0_i32_0 = arith.constant 0 : i32
    return %arg0, %arg1, %c0_i32 : i32, i32, i32
  }
}

</mosaic_0001>

<llo_original>
// kernel: tpu_custom_call.1
$region0: #{tpu_custom_call.1}
  #allocation0 [shape = 'u32[]', space=smem, size = 0x4, offset = 0x4, fixed_abs, tag = 'smem constant byte address 0x4 - core index']
  #allocation1 [shape = 'u32[144,128]{1,0:T(1,128)}', space=vmem, size = 0x12000, scoped, tag = 'internal scratch']
  #allocation2 [shape = 'f32[2,20,128]{2,1,0:T(8,128)}', space=vmem, size = 0x6000, scoped, tag = 'scratch operand']
  #allocation3 [shape = 's32[2]{0}', space=sflag, size = 0x8, scoped, tag = 'scratch operand']
  #allocation10 [shape = 's32[]', space=sflag, size = 0x4, offset = 0, fixed_abs, tag = 'sflag constant byte address 0x0 - dummy sync flag']
  #allocation11 [shape = 's32[]', space=sflag, size = 0x4, offset = 0, fixed_abs, tag = 'sflag constant byte address 0x0 - dummy sync flag']
  #allocation12 [shape = 's32[]', space=sflag, size = 0x4, offset = 0, fixed_abs, tag = 'sflag constant byte address 0x0 - dummy sync flag']
  #allocation13 [shape = 's32[]', space=sflag, size = 0x4, offset = 0, fixed_abs, tag = 'sflag constant byte address 0x0 - dummy sync flag']
  #allocation14 [shape = 's32[]', space=sflag, size = 0x4, offset = 0, fixed_abs, tag = 'sflag constant byte address 0x0 - dummy sync flag']
  #allocation15 [shape = 's32[]', space=sflag, size = 0x4, offset = 0, fixed_abs, tag = 'sflag constant byte address 0x0 - dummy sync flag']
  #allocation16 [shape = 's32[]', space=sflag, size = 0x4, offset = 0, fixed_abs, tag = 'sflag constant byte address 0x0 - dummy sync flag']
  #allocation17 [shape = 's32[]', space=sflag, size = 0x4, offset = 0, fixed_abs, tag = 'sflag constant byte address 0x0 - dummy sync flag']
  %s0 = inlined_call_operand.vmem [shape: f32[2,56,128], index: 0, kind: input, shape index: {}]
  %s1 = inlined_call_operand.vmem [shape: f32[2,64,16], index: 1, kind: input, shape index: {}]
  %s2 = inlined_call_operand.vmem [shape: f32[2,1,128], index: 2, kind: input, shape index: {}]
  %s3 = inlined_call_operand.hbm [shape: f32[384,256], index: 3, kind: input, shape index: {}]
  %s4 = inlined_call_operand.vmem [shape: f32[1,256], index: 4, kind: input, shape index: {}]
  %s5 = inlined_call_operand.vmem [shape: f32[16,256], index: 5, kind: input, shape index: {}]
  %s6 = inlined_call_operand.hbm [shape: f32[128,256], index: 6, kind: input, shape index: {}]
  %s7 = inlined_call_operand.vmem [shape: f32[1,256], index: 7, kind: input, shape index: {}]
  %s8 = inlined_call_operand.hbm [shape: f32[2,64,256], index: 8, kind: output, shape index: {}]
  %s9 = sld [smem:[#allocation0]]
  $region417: #{tpu_custom_call.1} parent=0
    _
  %s11 = ssub.s32 1, %s9
  %s12 = scalar_select 0, %s11, %s9
  $region1: #{tpu_custom_call.1} parent=0
    #allocation4 [shape = 'u8[393216]{0}', space=vmem, size = 0x60000, scoped, tag = 'input window, operand 3, single buffered']
    #allocation5 [shape = 's32[2]{0}', space=sflag, size = 0x8, scoped, tag = 'scoped memory for tpu_custom_call.1']
    #allocation6 [shape = 's32[2]{0}', space=sflag, size = 0x8, scoped, tag = 'scoped memory for tpu_custom_call.1']
    #allocation7 [shape = 'u8[131072]{0}', space=vmem, size = 0x20000, scoped, tag = 'input window, operand 6, single buffered']
    #allocation8 [shape = 's32[1]{0}', space=sflag, size = 0x4, scoped, tag = 'scoped memory for tpu_custom_call.1']
    #allocation9 [shape = 'u8[32768]{0}', space=vmem, size = 0x8000, scoped, tag = 'output window, operand 0']
    %13 = vsyncpa [#allocation5], 0
    %14 = vsyncpa [#allocation8], 0
    %15 = vsyncpa [#allocation6], 0
    %s16 = scalar_lea.sflag [#allocation6], 1
    %17 = vsyncpa %s16, 0
    loop: start=0, step=1, limit=10
    $region2: #{tpu_custom_call.1} parent=1 // loop_pre_header
      _
    $region3: #{tpu_custom_call.1} parent=1 // loop_header
      %s19 = sphi 0, %s23
      %p20 = scmp.ge.s32.totalorder %s19, 10
      %s26 = sphi 0, %s38
      %s27 = sphi 0, %s34
      %s28 = sphi 0, %s26
      %s29 = sphi 0, %s27
      %s30 = sphi 0, %s28
      %s31 = sphi 0, %s29
      %s43 = sphi 0, %s45
      %s46 = sphi 0, %s43
      %s47 = sphi 0, %s46
      %s63 = sphi 0, %s47
      %s69 = sphi 0, %s71
      %s72 = sphi 0, %s69
      %s73 = sphi 0, %s72
      %s89 = sphi 0, %s73
      %s93 = sphi 0, %s93
      %s95 = sphi 0, %s93
      %s96 = sphi 0, %s95
      %s110 = sphi 0, %s96
      %s114 = sphi 0, %s114
      %s116 = sphi 0, %s114
      %s117 = sphi 0, %s116
      %s131 = sphi 0, %s117
      %s135 = sphi 0, %s135
      %s137 = sphi 0, %s135
      %s138 = sphi 0, %s137
      %s152 = sphi 0, %s138
      %s156 = sphi 0, %s156
      %s158 = sphi 0, %s156
      %s159 = sphi 0, %s158
      %s173 = sphi 0, %s159
      %s177 = sphi 0, %s177
      %s179 = sphi 0, %s177
      %s180 = sphi 0, %s179
      %s194 = sphi 0, %s180
      %s202 = sphi 0, %s204
      %s205 = sphi 0, %s202
      %s206 = sphi 0, %s205
      %s222 = sphi 0, %s206
    $region4: #{tpu_custom_call.1} parent=1 // loop_header_branch
      %22 = sbr.rel (%p20) target = $region8
    $region5: #{tpu_custom_call.1} parent=1 // loop_body
      %s24 = ssub.s32 %s19, 1
      %s25 = ssub.s32 %s19, 2
      %s32 = sadd.s32 1, %s27
      %p33 = scmp.ge.s32.totalorder %s32, 4
      %s34 = scalar_select %p33, 0, %s32
      %s35 = sadd.s32 1, %s26
      %s36 = scalar_select %p33, %s35, %s26
      %p37 = scmp.ge.s32.totalorder %s36, 2
      %s38 = scalar_select %p37, 0, %s36
      %s39 = ssub.s32 %s26, %s38
      %s40 = ssub.s32 %s27, %s34
      %s41 = sor.u32 %s39, %s40
      %p42 = scmp.eq.s32.totalorder %s41, 0
      %s44 = sadd.s32 %s43, 1
      %s45 = scalar_select %p42, %s43, %s44
      %p48 = pneg %p42
      %p49 = scmp.eq.s32.totalorder %s19, 7
      %p50 = por %p48, %p49
      %p51 = scmp.ne.s32.totalorder %s43, %s46
      %p52 = scmp.eq.s32.totalorder %s19, 0
      %p53 = por %p51, %p52
      %p54 = scmp.ne.s32.totalorder %s43, %s46
      %p55 = scmp.eq.s32.totalorder %s24, 7
      %p56 = por %p54, %p55
      %p57 = scmp.ne.s32.totalorder %s46, %s47
      %p58 = scmp.eq.s32.totalorder %s24, 0
      %p59 = por %p57, %p58
      %p60 = scmp.ne.s32.totalorder %s46, %s47
      %p61 = scmp.eq.s32.totalorder %s25, 7
      %p62 = por %p60, %p61
      %p64 = scmp.ne.s32.totalorder %s47, %s63
      %p65 = scmp.eq.s32.totalorder %s25, 0
      %p66 = por %p64, %p65
      %s67 = ssub.s32 %s26, %s38
      %p68 = scmp.eq.s32.totalorder %s67, 0
      %s70 = sadd.s32 %s69, 1
      %s71 = scalar_select %p68, %s69, %s70
      %p74 = pneg %p68
      %p75 = scmp.eq.s32.totalorder %s19, 7
      %p76 = por %p74, %p75
      %p77 = scmp.ne.s32.totalorder %s69, %s72
      %p78 = scmp.eq.s32.totalorder %s19, 0
      %p79 = por %p77, %p78
      %p80 = scmp.ne.s32.totalorder %s69, %s72
      %p81 = scmp.eq.s32.totalorder %s24, 7
      %p82 = por %p80, %p81
      %p83 = scmp.ne.s32.totalorder %s72, %s73
      %p84 = scmp.eq.s32.totalorder %s24, 0
      %p85 = por %p83, %p84
      %p86 = scmp.ne.s32.totalorder %s72, %s73
      %p87 = scmp.eq.s32.totalorder %s25, 7
      %p88 = por %p86, %p87
      %p90 = scmp.ne.s32.totalorder %s73, %s89
      %p91 = scmp.eq.s32.totalorder %s25, 0
      %p92 = por %p90, %p91
      %s94 = sadd.s32 %s93, 1
      %p97 = scmp.eq.s32.totalorder %s19, 7
      %p98 = scmp.ne.s32.totalorder %s93, %s95
      %p99 = scmp.eq.s32.totalorder %s19, 0
      %p100 = por %p98, %p99
      %p101 = scmp.ne.s32.totalorder %s93, %s95
      %p102 = scmp.eq.s32.totalorder %s24, 7
      %p103 = por %p101, %p102
      %p104 = scmp.ne.s32.totalorder %s95, %s96
      %p105 = scmp.eq.s32.totalorder %s24, 0
      %p106 = por %p104, %p105
      %p107 = scmp.ne.s32.totalorder %s95, %s96
      %p108 = scmp.eq.s32.totalorder %s25, 7
      %p109 = por %p107, %p108
      %p111 = scmp.ne.s32.totalorder %s96, %s110
      %p112 = scmp.eq.s32.totalorder %s25, 0
      %p113 = por %p111, %p112
      %s115 = sadd.s32 %s114, 1
      %p118 = scmp.eq.s32.totalorder %s19, 7
      %p119 = scmp.ne.s32.totalorder %s114, %s116
      %p120 = scmp.eq.s32.totalorder %s19, 0
      %p121 = por %p119, %p120
      %p122 = scmp.ne.s32.totalorder %s114, %s116
      %p123 = scmp.eq.s32.totalorder %s24, 7
      %p124 = por %p122, %p123
      %p125 = scmp.ne.s32.totalorder %s116, %s117
      %p126 = scmp.eq.s32.totalorder %s24, 0
      %p127 = por %p125, %p126
      %p128 = scmp.ne.s32.totalorder %s116, %s117
      %p129 = scmp.eq.s32.totalorder %s25, 7
      %p130 = por %p128, %p129
      %p132 = scmp.ne.s32.totalorder %s117, %s131
      %p133 = scmp.eq.s32.totalorder %s25, 0
      %p134 = por %p132, %p133
      %s136 = sadd.s32 %s135, 1
      %p139 = scmp.eq.s32.totalorder %s19, 7
      %p140 = scmp.ne.s32.totalorder %s135, %s137
      %p141 = scmp.eq.s32.totalorder %s19, 0
      %p142 = por %p140, %p141
      %p143 = scmp.ne.s32.totalorder %s135, %s137
      %p144 = scmp.eq.s32.totalorder %s24, 7
      %p145 = por %p143, %p144
      %p146 = scmp.ne.s32.totalorder %s137, %s138
      %p147 = scmp.eq.s32.totalorder %s24, 0
      %p148 = por %p146, %p147
      %p149 = scmp.ne.s32.totalorder %s137, %s138
      %p150 = scmp.eq.s32.totalorder %s25, 7
      %p151 = por %p149, %p150
      %p153 = scmp.ne.s32.totalorder %s138, %s152
      %p154 = scmp.eq.s32.totalorder %s25, 0
      %p155 = por %p153, %p154
      %s157 = sadd.s32 %s156, 1
      %p160 = scmp.eq.s32.totalorder %s19, 7
      %p161 = scmp.ne.s32.totalorder %s156, %s158
      %p162 = scmp.eq.s32.totalorder %s19, 0
      %p163 = por %p161, %p162
      %p164 = scmp.ne.s32.totalorder %s156, %s158
      %p165 = scmp.eq.s32.totalorder %s24, 7
      %p166 = por %p164, %p165
      %p167 = scmp.ne.s32.totalorder %s158, %s159
      %p168 = scmp.eq.s32.totalorder %s24, 0
      %p169 = por %p167, %p168
      %p170 = scmp.ne.s32.totalorder %s158, %s159
      %p171 = scmp.eq.s32.totalorder %s25, 7
      %p172 = por %p170, %p171
      %p174 = scmp.ne.s32.totalorder %s159, %s173
      %p175 = scmp.eq.s32.totalorder %s25, 0
      %p176 = por %p174, %p175
      %s178 = sadd.s32 %s177, 1
      %p181 = scmp.eq.s32.totalorder %s19, 7
      %p182 = scmp.ne.s32.totalorder %s177, %s179
      %p183 = scmp.eq.s32.totalorder %s19, 0
      %p184 = por %p182, %p183
      %p185 = scmp.ne.s32.totalorder %s177, %s179
      %p186 = scmp.eq.s32.totalorder %s24, 7
      %p187 = por %p185, %p186
      %p188 = scmp.ne.s32.totalorder %s179, %s180
      %p189 = scmp.eq.s32.totalorder %s24, 0
      %p190 = por %p188, %p189
      %p191 = scmp.ne.s32.totalorder %s179, %s180
      %p192 = scmp.eq.s32.totalorder %s25, 7
      %p193 = por %p191, %p192
      %p195 = scmp.ne.s32.totalorder %s180, %s194
      %p196 = scmp.eq.s32.totalorder %s25, 0
      %p197 = por %p195, %p196
      %s198 = ssub.s32 %s26, %s38
      %s199 = ssub.s32 %s27, %s34
      %s200 = sor.u32 %s198, %s199
      %p201 = scmp.eq.s32.totalorder %s200, 0
      %s203 = sadd.s32 %s202, 1
      %s204 = scalar_select %p201, %s202, %s203
      %p207 = pneg %p201
      %p208 = scmp.eq.s32.totalorder %s19, 7
      %p209 = por %p207, %p208
      %p210 = scmp.ne.s32.totalorder %s202, %s205
      %p211 = scmp.eq.s32.totalorder %s19, 0
      %p212 = por %p210, %p211
      %p213 = scmp.ne.s32.totalorder %s202, %s205
      %p214 = scmp.eq.s32.totalorder %s24, 7
      %p215 = por %p213, %p214
      %p216 = scmp.ne.s32.totalorder %s205, %s206
      %p217 = scmp.eq.s32.totalorder %s24, 0
      %p218 = por %p216, %p217
      %p219 = scmp.ne.s32.totalorder %s205, %s206
      %p220 = scmp.eq.s32.totalorder %s25, 7
      %p221 = por %p219, %p220
      %p223 = scmp.ne.s32.totalorder %s206, %s222
      %p224 = scmp.eq.s32.totalorder %s25, 0
      %p225 = por %p223, %p224
      %p226 = scmp.le.s32.totalorder 1, %s19
      %p227 = scmp.lt.s32.totalorder %s19, 9
      %p228 = pnand %p226, %p227
      %p229 = pneg %p228
      // Predicated region
      $region9: #{tpu_custom_call.1} parent=5 // pred_check
        _
      $region10: #{tpu_custom_call.1} parent=5 // pred_check_branch
        %231 = sbr.rel (%p228) target = $region12
      $region11: #{tpu_custom_call.1} parent=5 // pred_region
        %s232 = ssub.s32 %s19, 1
        // Predicated region
        $region13: #{tpu_custom_call.1} parent=11 // pred_check
          %p233 = pneg %p106
        $region14: #{tpu_custom_call.1} parent=11 // pred_check_branch
          %235 = sbr.rel (%p233) target = $region16
        $region15: #{tpu_custom_call.1} parent=11 // pred_region
          %s237 = ssub.s32 12288, 12288
          %238 = vsyncadd [#allocation5], %s237
          %s239 = sshll.u32 [#allocation4], 4
          %s240 = int_to_ptr.vmem [resolvable:$true] %s239
          %245 = dma.hbm_to_vmem [thread:$0]  %s3, 12288, %s240, [#allocation5], 256, 256, 16
        $region16: #{tpu_custom_call.1} parent=11 // pred_fallthru
          _
        // Predicated region
        $region17: #{tpu_custom_call.1} parent=11 // pred_check
          %p246 = pneg %p127
        $region18: #{tpu_custom_call.1} parent=11 // pred_check_branch
          %248 = sbr.rel (%p246) target = $region20
        $region19: #{tpu_custom_call.1} parent=11 // pred_region
          _
        $region20: #{tpu_custom_call.1} parent=11 // pred_fallthru
          _
        // Predicated region
        $region21: #{tpu_custom_call.1} parent=11 // pred_check
          %p249 = pneg %p148
        $region22: #{tpu_custom_call.1} parent=11 // pred_check_branch
          %251 = sbr.rel (%p249) target = $region24
        $region23: #{tpu_custom_call.1} parent=11 // pred_region
          _
        $region24: #{tpu_custom_call.1} parent=11 // pred_fallthru
          _
        // Predicated region
        $region25: #{tpu_custom_call.1} parent=11 // pred_check
          %p252 = pneg %p169
        $region26: #{tpu_custom_call.1} parent=11 // pred_check_branch
          %254 = sbr.rel (%p252) target = $region28
        $region27: #{tpu_custom_call.1} parent=11 // pred_region
          %s256 = ssub.s32 4096, 4096
          %257 = vsyncadd [#allocation8], %s256
          %s258 = sshll.u32 [#allocation7], 4
          %s259 = int_to_ptr.vmem [resolvable:$true] %s258
          %264 = dma.hbm_to_vmem [thread:$0]  %s6, 4096, %s259, [#allocation8], 256, 256, 16
        $region28: #{tpu_custom_call.1} parent=11 // pred_fallthru
          _
        // Predicated region
        $region29: #{tpu_custom_call.1} parent=11 // pred_check
          %p265 = pneg %p190
        $region30: #{tpu_custom_call.1} parent=11 // pred_check_branch
          %267 = sbr.rel (%p265) target = $region32
        $region31: #{tpu_custom_call.1} parent=11 // pred_region
          _
        $region32: #{tpu_custom_call.1} parent=11 // pred_fallthru
          _
      $region12: #{tpu_custom_call.1} parent=5 // pred_fallthru
        _
      %p268 = scmp.lt.s32.totalorder %s19, 8
      // Predicated region
      $region33: #{tpu_custom_call.1} parent=5 // pred_check
        %p269 = pneg %p268
      $region34: #{tpu_custom_call.1} parent=5 // pred_check_branch
        %271 = sbr.rel (%p269) target = $region36
      $region35: #{tpu_custom_call.1} parent=5 // pred_region
        // Predicated region
        $region37: #{tpu_custom_call.1} parent=35 // pred_check
          %p272 = pneg %p53
        $region38: #{tpu_custom_call.1} parent=35 // pred_check_branch
          %274 = sbr.rel (%p272) target = $region40
        $region39: #{tpu_custom_call.1} parent=35 // pred_region
          %s275 = smul.u32 2, %s27
          %p276 = scmp.lt.s32.totalorder %s26, 1
          %s277 = scalar_select %p276, %s26, 1
          %p278 = scmp.lt.s32.totalorder %s275, 7
          %s279 = scalar_select %p278, %s275, 7
          %s280 = smul.addr %s277, 8
          %s281 = sadd.s32 %s279, %s280
          %s282 = smul.addr %s281, 8
          %s283 = scalar_lea.vmem %s1, %s282
          %s284 = smul.u32 2, %s27
        $region40: #{tpu_custom_call.1} parent=35 // pred_fallthru
          _
        // Predicated region
        $region41: #{tpu_custom_call.1} parent=35 // pred_check
          %p285 = pneg %p79
        $region42: #{tpu_custom_call.1} parent=35 // pred_check_branch
          %287 = sbr.rel (%p285) target = $region44
        $region43: #{tpu_custom_call.1} parent=35 // pred_region
          %p288 = scmp.lt.s32.totalorder %s26, 1
          %s289 = scalar_select %p288, %s26, 1
          %s290 = scalar_lea.vmem %s2, %s289
        $region44: #{tpu_custom_call.1} parent=35 // pred_fallthru
          _
      $region36: #{tpu_custom_call.1} parent=5 // pred_fallthru
        _
      %p291 = scmp.le.s32.totalorder 1, %s19
      %p292 = scmp.lt.s32.totalorder %s19, 9
      %p293 = pnand %p291, %p292
      %p294 = pneg %p293
      // Predicated region
      $region45: #{tpu_custom_call.1} parent=5 // pred_check
        _
      $region46: #{tpu_custom_call.1} parent=5 // pred_check_branch
        %296 = sbr.rel (%p293) target = $region48
      $region47: #{tpu_custom_call.1} parent=5 // pred_region
        %s297 = ssub.s32 %s19, 1
        // Predicated region
        $region49: #{tpu_custom_call.1} parent=47 // pred_check
          %p298 = pneg %p106
        $region50: #{tpu_custom_call.1} parent=47 // pred_check_branch
          %300 = sbr.rel (%p298) target = $region52
        $region51: #{tpu_custom_call.1} parent=47 // pred_region
          %301 = dma.done [#allocation5], 12288
        $region52: #{tpu_custom_call.1} parent=47 // pred_fallthru
          _
        // Predicated region
        $region53: #{tpu_custom_call.1} parent=47 // pred_check
          %p302 = pneg %p169
        $region54: #{tpu_custom_call.1} parent=47 // pred_check_branch
          %304 = sbr.rel (%p302) target = $region56
        $region55: #{tpu_custom_call.1} parent=47 // pred_region
          %305 = dma.done [#allocation8], 4096
        $region56: #{tpu_custom_call.1} parent=47 // pred_fallthru
          _
        %s306 = smul.u32 2, %s29
        %p307 = scmp.lt.s32.totalorder %s28, 1
        %s308 = scalar_select %p307, %s28, 1
        %p309 = scmp.lt.s32.totalorder %s306, 7
        %s310 = scalar_select %p309, %s306, 7
        %s311 = smul.addr %s308, 8
        %s312 = sadd.s32 %s310, %s311
        %s313 = smul.addr %s312, 8
        %s314 = scalar_lea.vmem %s1, %s313
        %p315 = pneg %p59
        %p316 = pneg %p56
        %p317 = scmp.lt.s32.totalorder %s28, 1
        %s318 = scalar_select %p317, %s28, 1
        %s319 = scalar_lea.vmem %s2, %s318
        %p320 = pneg %p85
        %p321 = pneg %p82
        %p322 = pneg %p106
        %p323 = pneg %p103
        %p324 = pneg %p127
        %p325 = pneg %p124
        %p326 = pneg %p148
        %p327 = pneg %p145
        %p328 = pneg %p169
        %p329 = pneg %p166
        %p330 = pneg %p190
        %p331 = pneg %p187
        %p332 = pneg %p218
        %p333 = pneg %p215
        %s334 = sand.u32 %s205, 1
        %s335 = scalar_lea.sflag [#allocation6], %s334
        %s336 = sand.u32 %s205, 1
        %s337 = smul.addr %s336, 32
        %s338 = scalar_lea.vmem [#allocation9], %s337
        %s339 = smul.u32 2, %s29
        %p340 = scmp.lt.s32.totalorder %s28, 1
        %s341 = scalar_select %p340, %s28, 1
        %p342 = scmp.lt.s32.totalorder %s339, 7
        %s343 = scalar_select %p342, %s339, 7
        %s344 = smul.addr %s341, 8
        %s345 = sadd.s32 %s343, %s344
        %s346 = smul.addr %s345, 8
        %s347 = scalar_lea.vmem %s1, %s346
        %s348 = smul.u32 2, %s29
        %p349 = scmp.lt.s32.totalorder %s28, 1
        %s350 = scalar_select %p349, %s28, 1
        %s351 = scalar_lea.vmem %s2, %s350
        %s352 = smul.u32 2, %s29
        %p353 = scmp.lt.s32.totalorder %s29, 0
        %s354 = ssub.s32 0, %s29
        %s355 = scalar_select %p353, %s354, %s29
        %s356 = sand.u32 %s355, 1
        %s357 = ssub.s32 0, %s356
        %s358 = scalar_select %p353, %s357, %s356
        %p359 = scmp.ne.s32.totalorder %s358, 0
        %p360 = scmp.lt.s32.totalorder %s358, 0
        %p361 = pnand %p360, %p359
        %p362 = pneg %p361
        %s363 = sadd.s32 %s358, 2
        %s364 = scalar_select %p362, %s363, %s358
        %p365 = scmp.eq.s32.totalorder %s29, 0
        // Predicated region
        $region57: #{tpu_custom_call.1} parent=47 // pred_check
          %p366 = pneg %p365
        $region58: #{tpu_custom_call.1} parent=47 // pred_check_branch
          %368 = sbr.rel (%p366) target = $region60
        $region59: #{tpu_custom_call.1} parent=47 // pred_region
          %s369 = smul.u32 %s29, 16
          %s370 = smul.u32 %s28, 56
          %s371 = sadd.s32 %s369, %s370
          %s372 = scalar_lea.vmem %s0, %s371
          %s373 = smul.u32 %s364, 24
          %s374 = sadd.s32 2, %s373
          %s375 = scalar_lea.vmem [#allocation2], %s374
          %s376 = scalar_lea.sflag [#allocation3], %s364
          %p378 = scmp.lt.u32.totalorder 18, 8
          %p379 = pneg %p378
          // Predicated region
          $region61: #{tpu_custom_call.1} parent=59 // pred_check
            _
          $region62: #{tpu_custom_call.1} parent=59 // pred_check_branch
            %381 = sbr.rel (%p378) target = $region64
          $region63: #{tpu_custom_call.1} parent=59 // pred_region
            %s396 = sand.u32 18, 7
            %p397 = scmp.eq.s32.totalorder %s396, 0
            %p398 = pneg %p397
            // Predicated region
            $region76: #{tpu_custom_call.1} parent=63 // pred_check
              _
            $region77: #{tpu_custom_call.1} parent=63 // pred_check_branch
              %400 = sbr.rel (%p397) target = $region79
            $region78: #{tpu_custom_call.1} parent=63 // pred_region
              %s401 = sand.u32 18, 7
              %s402 = ssub.s32 18, %s401
              %s403 = scalar_lea.vmem %s372, %s402
              %s404 = ssub.s32 18, %s401
              %s405 = scalar_lea.vmem %s375, %s404 [#allocation2]
              loop: start=0, step=1, limit=1
              $region80: #{tpu_custom_call.1} parent=78 // loop_pre_header
                _
              $region81: #{tpu_custom_call.1} parent=78 // loop_header
                %s407 = sphi 0, %s411
                %p408 = scmp.ge.s32.totalorder %s407, 1
                %s412 = sphi %s372, %s372
                %s413 = sphi %s375, %s375
              $region82: #{tpu_custom_call.1} parent=78 // loop_header_branch
                %410 = sbr.rel (%p408) target = $region86
              $region83: #{tpu_custom_call.1} parent=78 // loop_body
                %v414 = vld [vmem:[%s412] sm:$0xff]
                %415 = vst [vmem:[%s413] sm:$0xff] %v414
                %v416 = vld [vmem:[%s412 + $0x8] sm:$0xff]
                %417 = vst [vmem:[%s413 + $0x8] sm:$0xff] %v416
              $region84: #{tpu_custom_call.1} parent=78 // loop_footer
                %s411 = sadd.s32 1, %s407
              $region85: #{tpu_custom_call.1} parent=78 // loop_footer_branch
                %406 = sbr.rel target = $region81
              $region86: #{tpu_custom_call.1} parent=78 // loop_exit
                _
              %s418 = sshllo.u32 0, %s401
              loop: start=0, step=1, limit=1
              $region87: #{tpu_custom_call.1} parent=78 // loop_pre_header
                _
              $region88: #{tpu_custom_call.1} parent=78 // loop_header
                %s420 = sphi 0, %s424
                %p421 = scmp.ge.s32.totalorder %s420, 1
                %s425 = sphi %s403, %s403
                %s426 = sphi %s405, %s405
              $region89: #{tpu_custom_call.1} parent=78 // loop_header_branch
                %423 = sbr.rel (%p421) target = $region93
              $region90: #{tpu_custom_call.1} parent=78 // loop_body
                %v427 = vld [vmem:[%s425] sm:%s418]
                %428 = vst [vmem:[%s426] sm:%s418] %v427
              $region91: #{tpu_custom_call.1} parent=78 // loop_footer
                %s424 = sadd.s32 1, %s420
              $region92: #{tpu_custom_call.1} parent=78 // loop_footer_branch
                %419 = sbr.rel target = $region88
              $region93: #{tpu_custom_call.1} parent=78 // loop_exit
                _
            $region79: #{tpu_custom_call.1} parent=63 // pred_fallthru
              _
          $region64: #{tpu_custom_call.1} parent=59 // pred_fallthru
            _
          // Predicated region
          $region65: #{tpu_custom_call.1} parent=59 // pred_check
            %p382 = pneg %p378
          $region66: #{tpu_custom_call.1} parent=59 // pred_check_branch
            %384 = sbr.rel (%p382) target = $region68
          $region67: #{tpu_custom_call.1} parent=59 // pred_region
            %s385 = sshllo.u32 0, 18
            loop: start=0, step=1, limit=1
            $region69: #{tpu_custom_call.1} parent=67 // loop_pre_header
              _
            $region70: #{tpu_custom_call.1} parent=67 // loop_header
              %s387 = sphi 0, %s391
              %p388 = scmp.ge.s32.totalorder %s387, 1
              %s392 = sphi %s372, %s372
              %s393 = sphi %s375, %s375
            $region71: #{tpu_custom_call.1} parent=67 // loop_header_branch
              %390 = sbr.rel (%p388) target = $region75
            $region72: #{tpu_custom_call.1} parent=67 // loop_body
              %v394 = vld [vmem:[%s392] sm:%s385]
              %395 = vst [vmem:[%s393] sm:%s385] %v394
            $region73: #{tpu_custom_call.1} parent=67 // loop_footer
              %s391 = sadd.s32 1, %s387
            $region74: #{tpu_custom_call.1} parent=67 // loop_footer_branch
              %386 = sbr.rel target = $region70
            $region75: #{tpu_custom_call.1} parent=67 // loop_exit
              _
          $region68: #{tpu_custom_call.1} parent=59 // pred_fallthru
            _
          // Predicated region
          $region94: #{tpu_custom_call.1} parent=59 // pred_check
            _
          $region95: #{tpu_custom_call.1} parent=59 // pred_check_branch
            %431 = sbr.rel (0) target = $region97
          $region96: #{tpu_custom_call.1} parent=59 // pred_region
            %432 = vsyncadd %s376, 288
          $region97: #{tpu_custom_call.1} parent=59 // pred_fallthru
            _
          %p433 = scmp.eq.s32.totalorder %s29, 3
          // Predicated region
          $region98: #{tpu_custom_call.1} parent=59 // pred_check
            %p434 = pneg %p433
          $region99: #{tpu_custom_call.1} parent=59 // pred_check_branch
            %436 = sbr.rel (%p434) target = $region101
          $region100: #{tpu_custom_call.1} parent=59 // pred_region
            %s437 = ssub.s32 %s369, 2
            %s438 = sadd.s32 %s437, %s370
            %s439 = scalar_lea.vmem %s0, %s438
            %s440 = scalar_lea.vmem [#allocation2], %s373
            %p442 = scmp.lt.u32.totalorder 10, 8
            %p443 = pneg %p442
            // Predicated region
            $region102: #{tpu_custom_call.1} parent=100 // pred_check
              _
            $region103: #{tpu_custom_call.1} parent=100 // pred_check_branch
              %445 = sbr.rel (%p442) target = $region105
            $region104: #{tpu_custom_call.1} parent=100 // pred_region
              %s460 = sand.u32 10, 7
              %p461 = scmp.eq.s32.totalorder %s460, 0
              %p462 = pneg %p461
              // Predicated region
              $region117: #{tpu_custom_call.1} parent=104 // pred_check
                _
              $region118: #{tpu_custom_call.1} parent=104 // pred_check_branch
                %464 = sbr.rel (%p461) target = $region120
              $region119: #{tpu_custom_call.1} parent=104 // pred_region
                %s465 = sand.u32 10, 7
                %s466 = ssub.s32 10, %s465
                %s467 = scalar_lea.vmem %s439, %s466
                %s468 = ssub.s32 10, %s465
                %s469 = scalar_lea.vmem %s440, %s468 [#allocation2]
                loop: start=0, step=1, limit=1
                $region121: #{tpu_custom_call.1} parent=119 // loop_pre_header
                  _
                $region122: #{tpu_custom_call.1} parent=119 // loop_header
                  %s471 = sphi 0, %s475
                  %p472 = scmp.ge.s32.totalorder %s471, 1
                  %s476 = sphi %s439, %s439
                  %s477 = sphi %s440, %s440
                $region123: #{tpu_custom_call.1} parent=119 // loop_header_branch
                  %474 = sbr.rel (%p472) target = $region127
                $region124: #{tpu_custom_call.1} parent=119 // loop_body
                  %v478 = vld [vmem:[%s476] sm:$0xff]
                  %479 = vst [vmem:[%s477] sm:$0xff] %v478
                $region125: #{tpu_custom_call.1} parent=119 // loop_footer
                  %s475 = sadd.s32 1, %s471
                $region126: #{tpu_custom_call.1} parent=119 // loop_footer_branch
                  %470 = sbr.rel target = $region122
                $region127: #{tpu_custom_call.1} parent=119 // loop_exit
                  _
                %s480 = sshllo.u32 0, %s465
                loop: start=0, step=1, limit=1
                $region128: #{tpu_custom_call.1} parent=119 // loop_pre_header
                  _
                $region129: #{tpu_custom_call.1} parent=119 // loop_header
                  %s482 = sphi 0, %s486
                  %p483 = scmp.ge.s32.totalorder %s482, 1
                  %s487 = sphi %s467, %s467
                  %s488 = sphi %s469, %s469
                $region130: #{tpu_custom_call.1} parent=119 // loop_header_branch
                  %485 = sbr.rel (%p483) target = $region134
                $region131: #{tpu_custom_call.1} parent=119 // loop_body
                  %v489 = vld [vmem:[%s487] sm:%s480]
                  %490 = vst [vmem:[%s488] sm:%s480] %v489
                $region132: #{tpu_custom_call.1} parent=119 // loop_footer
                  %s486 = sadd.s32 1, %s482
                $region133: #{tpu_custom_call.1} parent=119 // loop_footer_branch
                  %481 = sbr.rel target = $region129
                $region134: #{tpu_custom_call.1} parent=119 // loop_exit
                  _
              $region120: #{tpu_custom_call.1} parent=104 // pred_fallthru
                _
            $region105: #{tpu_custom_call.1} parent=100 // pred_fallthru
              _
            // Predicated region
            $region106: #{tpu_custom_call.1} parent=100 // pred_check
              %p446 = pneg %p442
            $region107: #{tpu_custom_call.1} parent=100 // pred_check_branch
              %448 = sbr.rel (%p446) target = $region109
            $region108: #{tpu_custom_call.1} parent=100 // pred_region
              %s449 = sshllo.u32 0, 10
              loop: start=0, step=1, limit=1
              $region110: #{tpu_custom_call.1} parent=108 // loop_pre_header
                _
              $region111: #{tpu_custom_call.1} parent=108 // loop_header
                %s451 = sphi 0, %s455
                %p452 = scmp.ge.s32.totalorder %s451, 1
                %s456 = sphi %s439, %s439
                %s457 = sphi %s440, %s440
              $region112: #{tpu_custom_call.1} parent=108 // loop_header_branch
                %454 = sbr.rel (%p452) target = $region116
              $region113: #{tpu_custom_call.1} parent=108 // loop_body
                %v458 = vld [vmem:[%s456] sm:%s449]
                %459 = vst [vmem:[%s457] sm:%s449] %v458
              $region114: #{tpu_custom_call.1} parent=108 // loop_footer
                %s455 = sadd.s32 1, %s451
              $region115: #{tpu_custom_call.1} parent=108 // loop_footer_branch
                %450 = sbr.rel target = $region111
              $region116: #{tpu_custom_call.1} parent=108 // loop_exit
                _
            $region109: #{tpu_custom_call.1} parent=100 // pred_fallthru
              _
            // Predicated region
            $region135: #{tpu_custom_call.1} parent=100 // pred_check
              _
            $region136: #{tpu_custom_call.1} parent=100 // pred_check_branch
              %493 = sbr.rel (0) target = $region138
            $region137: #{tpu_custom_call.1} parent=100 // pred_region
              %494 = vsyncadd %s376, 160
            $region138: #{tpu_custom_call.1} parent=100 // pred_fallthru
              _
          $region101: #{tpu_custom_call.1} parent=59 // pred_fallthru
            _
          %p495 = scmp.eq.s32.totalorder %s29, 2
          // Predicated region
          $region139: #{tpu_custom_call.1} parent=59 // pred_check
            %p496 = pneg %p495
          $region140: #{tpu_custom_call.1} parent=59 // pred_check_branch
            %498 = sbr.rel (%p496) target = $region142
          $region141: #{tpu_custom_call.1} parent=59 // pred_region
            %s499 = ssub.s32 %s369, 2
            %s500 = sadd.s32 %s499, %s370
            %s501 = scalar_lea.vmem %s0, %s500
            %s502 = scalar_lea.vmem [#allocation2], %s373
            %p504 = scmp.lt.u32.totalorder 20, 8
            %p505 = pneg %p504
            // Predicated region
            $region143: #{tpu_custom_call.1} parent=141 // pred_check
              _
            $region144: #{tpu_custom_call.1} parent=141 // pred_check_branch
              %507 = sbr.rel (%p504) target = $region146
            $region145: #{tpu_custom_call.1} parent=141 // pred_region
              %s522 = sand.u32 20, 7
              %p523 = scmp.eq.s32.totalorder %s522, 0
              %p524 = pneg %p523
              // Predicated region
              $region158: #{tpu_custom_call.1} parent=145 // pred_check
                _
              $region159: #{tpu_custom_call.1} parent=145 // pred_check_branch
                %526 = sbr.rel (%p523) target = $region161
              $region160: #{tpu_custom_call.1} parent=145 // pred_region
                %s527 = sand.u32 20, 7
                %s528 = ssub.s32 20, %s527
                %s529 = scalar_lea.vmem %s501, %s528
                %s530 = ssub.s32 20, %s527
                %s531 = scalar_lea.vmem %s502, %s530 [#allocation2]
                loop: start=0, step=1, limit=1
                $region162: #{tpu_custom_call.1} parent=160 // loop_pre_header
                  _
                $region163: #{tpu_custom_call.1} parent=160 // loop_header
                  %s533 = sphi 0, %s537
                  %p534 = scmp.ge.s32.totalorder %s533, 1
                  %s538 = sphi %s501, %s501
                  %s539 = sphi %s502, %s502
                $region164: #{tpu_custom_call.1} parent=160 // loop_header_branch
                  %536 = sbr.rel (%p534) target = $region168
                $region165: #{tpu_custom_call.1} parent=160 // loop_body
                  %v540 = vld [vmem:[%s538] sm:$0xff]
                  %541 = vst [vmem:[%s539] sm:$0xff] %v540
                  %v542 = vld [vmem:[%s538 + $0x8] sm:$0xff]
                  %543 = vst [vmem:[%s539 + $0x8] sm:$0xff] %v542
                $region166: #{tpu_custom_call.1} parent=160 // loop_footer
                  %s537 = sadd.s32 1, %s533
                $region167: #{tpu_custom_call.1} parent=160 // loop_footer_branch
                  %532 = sbr.rel target = $region163
                $region168: #{tpu_custom_call.1} parent=160 // loop_exit
                  _
                %s544 = sshllo.u32 0, %s527
                loop: start=0, step=1, limit=1
                $region169: #{tpu_custom_call.1} parent=160 // loop_pre_header
                  _
                $region170: #{tpu_custom_call.1} parent=160 // loop_header
                  %s546 = sphi 0, %s550
                  %p547 = scmp.ge.s32.totalorder %s546, 1
                  %s551 = sphi %s529, %s529
                  %s552 = sphi %s531, %s531
                $region171: #{tpu_custom_call.1} parent=160 // loop_header_branch
                  %549 = sbr.rel (%p547) target = $region175
                $region172: #{tpu_custom_call.1} parent=160 // loop_body
                  %v553 = vld [vmem:[%s551] sm:%s544]
                  %554 = vst [vmem:[%s552] sm:%s544] %v553
                $region173: #{tpu_custom_call.1} parent=160 // loop_footer
                  %s550 = sadd.s32 1, %s546
                $region174: #{tpu_custom_call.1} parent=160 // loop_footer_branch
                  %545 = sbr.rel target = $region170
                $region175: #{tpu_custom_call.1} parent=160 // loop_exit
                  _
              $region161: #{tpu_custom_call.1} parent=145 // pred_fallthru
                _
            $region146: #{tpu_custom_call.1} parent=141 // pred_fallthru
              _
            // Predicated region
            $region147: #{tpu_custom_call.1} parent=141 // pred_check
              %p508 = pneg %p504
            $region148: #{tpu_custom_call.1} parent=141 // pred_check_branch
              %510 = sbr.rel (%p508) target = $region150
            $region149: #{tpu_custom_call.1} parent=141 // pred_region
              %s511 = sshllo.u32 0, 20
              loop: start=0, step=1, limit=1
              $region151: #{tpu_custom_call.1} parent=149 // loop_pre_header
                _
              $region152: #{tpu_custom_call.1} parent=149 // loop_header
                %s513 = sphi 0, %s517
                %p514 = scmp.ge.s32.totalorder %s513, 1
                %s518 = sphi %s501, %s501
                %s519 = sphi %s502, %s502
              $region153: #{tpu_custom_call.1} parent=149 // loop_header_branch
                %516 = sbr.rel (%p514) target = $region157
              $region154: #{tpu_custom_call.1} parent=149 // loop_body
                %v520 = vld [vmem:[%s518] sm:%s511]
                %521 = vst [vmem:[%s519] sm:%s511] %v520
              $region155: #{tpu_custom_call.1} parent=149 // loop_footer
                %s517 = sadd.s32 1, %s513
              $region156: #{tpu_custom_call.1} parent=149 // loop_footer_branch
                %512 = sbr.rel target = $region152
              $region157: #{tpu_custom_call.1} parent=149 // loop_exit
                _
            $region150: #{tpu_custom_call.1} parent=141 // pred_fallthru
              _
            // Predicated region
            $region176: #{tpu_custom_call.1} parent=141 // pred_check
              _
            $region177: #{tpu_custom_call.1} parent=141 // pred_check_branch
              %557 = sbr.rel (0) target = $region179
            $region178: #{tpu_custom_call.1} parent=141 // pred_region
              %558 = vsyncadd %s376, 320
            $region179: #{tpu_custom_call.1} parent=141 // pred_fallthru
              _
          $region142: #{tpu_custom_call.1} parent=59 // pred_fallthru
            _
          %p559 = scmp.ge.s32.totalorder %s29, 1
          %p560 = scmp.le.s32.totalorder %s29, 1
          %p561 = pnand %p559, %p560
          %p562 = pneg %p561
          // Predicated region
          $region180: #{tpu_custom_call.1} parent=59 // pred_check
            _
          $region181: #{tpu_custom_call.1} parent=59 // pred_check_branch
            %564 = sbr.rel (%p561) target = $region183
          $region182: #{tpu_custom_call.1} parent=59 // pred_region
            %s565 = ssub.s32 %s369, 2
            %s566 = sadd.s32 %s565, %s370
            %s567 = scalar_lea.vmem %s0, %s566
            %s568 = scalar_lea.vmem [#allocation2], %s373
            %p570 = scmp.lt.u32.totalorder 20, 8
            %p571 = pneg %p570
            // Predicated region
            $region184: #{tpu_custom_call.1} parent=182 // pred_check
              _
            $region185: #{tpu_custom_call.1} parent=182 // pred_check_branch
              %573 = sbr.rel (%p570) target = $region187
            $region186: #{tpu_custom_call.1} parent=182 // pred_region
              %s588 = sand.u32 20, 7
              %p589 = scmp.eq.s32.totalorder %s588, 0
              %p590 = pneg %p589
              // Predicated region
              $region199: #{tpu_custom_call.1} parent=186 // pred_check
                _
              $region200: #{tpu_custom_call.1} parent=186 // pred_check_branch
                %592 = sbr.rel (%p589) target = $region202
              $region201: #{tpu_custom_call.1} parent=186 // pred_region
                %s593 = sand.u32 20, 7
                %s594 = ssub.s32 20, %s593
                %s595 = scalar_lea.vmem %s567, %s594
                %s596 = ssub.s32 20, %s593
                %s597 = scalar_lea.vmem %s568, %s596 [#allocation2]
                loop: start=0, step=1, limit=1
                $region203: #{tpu_custom_call.1} parent=201 // loop_pre_header
                  _
                $region204: #{tpu_custom_call.1} parent=201 // loop_header
                  %s599 = sphi 0, %s603
                  %p600 = scmp.ge.s32.totalorder %s599, 1
                  %s604 = sphi %s567, %s567
                  %s605 = sphi %s568, %s568
                $region205: #{tpu_custom_call.1} parent=201 // loop_header_branch
                  %602 = sbr.rel (%p600) target = $region209
                $region206: #{tpu_custom_call.1} parent=201 // loop_body
                  %v606 = vld [vmem:[%s604] sm:$0xff]
                  %607 = vst [vmem:[%s605] sm:$0xff] %v606
                  %v608 = vld [vmem:[%s604 + $0x8] sm:$0xff]
                  %609 = vst [vmem:[%s605 + $0x8] sm:$0xff] %v608
                $region207: #{tpu_custom_call.1} parent=201 // loop_footer
                  %s603 = sadd.s32 1, %s599
                $region208: #{tpu_custom_call.1} parent=201 // loop_footer_branch
                  %598 = sbr.rel target = $region204
                $region209: #{tpu_custom_call.1} parent=201 // loop_exit
                  _
                %s610 = sshllo.u32 0, %s593
                loop: start=0, step=1, limit=1
                $region210: #{tpu_custom_call.1} parent=201 // loop_pre_header
                  _
                $region211: #{tpu_custom_call.1} parent=201 // loop_header
                  %s612 = sphi 0, %s616
                  %p613 = scmp.ge.s32.totalorder %s612, 1
                  %s617 = sphi %s595, %s595
                  %s618 = sphi %s597, %s597
                $region212: #{tpu_custom_call.1} parent=201 // loop_header_branch
                  %615 = sbr.rel (%p613) target = $region216
                $region213: #{tpu_custom_call.1} parent=201 // loop_body
                  %v619 = vld [vmem:[%s617] sm:%s610]
                  %620 = vst [vmem:[%s618] sm:%s610] %v619
                $region214: #{tpu_custom_call.1} parent=201 // loop_footer
                  %s616 = sadd.s32 1, %s612
                $region215: #{tpu_custom_call.1} parent=201 // loop_footer_branch
                  %611 = sbr.rel target = $region211
                $region216: #{tpu_custom_call.1} parent=201 // loop_exit
                  _
              $region202: #{tpu_custom_call.1} parent=186 // pred_fallthru
                _
            $region187: #{tpu_custom_call.1} parent=182 // pred_fallthru
              _
            // Predicated region
            $region188: #{tpu_custom_call.1} parent=182 // pred_check
              %p574 = pneg %p570
            $region189: #{tpu_custom_call.1} parent=182 // pred_check_branch
              %576 = sbr.rel (%p574) target = $region191
            $region190: #{tpu_custom_call.1} parent=182 // pred_region
              %s577 = sshllo.u32 0, 20
              loop: start=0, step=1, limit=1
              $region192: #{tpu_custom_call.1} parent=190 // loop_pre_header
                _
              $region193: #{tpu_custom_call.1} parent=190 // loop_header
                %s579 = sphi 0, %s583
                %p580 = scmp.ge.s32.totalorder %s579, 1
                %s584 = sphi %s567, %s567
                %s585 = sphi %s568, %s568
              $region194: #{tpu_custom_call.1} parent=190 // loop_header_branch
                %582 = sbr.rel (%p580) target = $region198
              $region195: #{tpu_custom_call.1} parent=190 // loop_body
                %v586 = vld [vmem:[%s584] sm:%s577]
                %587 = vst [vmem:[%s585] sm:%s577] %v586
              $region196: #{tpu_custom_call.1} parent=190 // loop_footer
                %s583 = sadd.s32 1, %s579
              $region197: #{tpu_custom_call.1} parent=190 // loop_footer_branch
                %578 = sbr.rel target = $region193
              $region198: #{tpu_custom_call.1} parent=190 // loop_exit
                _
            $region191: #{tpu_custom_call.1} parent=182 // pred_fallthru
              _
            // Predicated region
            $region217: #{tpu_custom_call.1} parent=182 // pred_check
              _
            $region218: #{tpu_custom_call.1} parent=182 // pred_check_branch
              %623 = sbr.rel (0) target = $region220
            $region219: #{tpu_custom_call.1} parent=182 // pred_region
              %624 = vsyncadd %s376, 320
            $region220: #{tpu_custom_call.1} parent=182 // pred_fallthru
              _
          $region183: #{tpu_custom_call.1} parent=59 // pred_fallthru
            _
        $region60: #{tpu_custom_call.1} parent=47 // pred_fallthru
          _
        %s625 = sadd.s32 %s29, 1
        %p626 = scmp.lt.s32.totalorder %s625, 4
        // Predicated region
        $region221: #{tpu_custom_call.1} parent=47 // pred_check
          %p627 = pneg %p626
        $region222: #{tpu_custom_call.1} parent=47 // pred_check_branch
          %629 = sbr.rel (%p627) target = $region224
        $region223: #{tpu_custom_call.1} parent=47 // pred_region
          %s630 = ssub.s32 1, %s364
          %p631 = scmp.eq.s32.totalorder %s625, 0
          // Predicated region
          $region225: #{tpu_custom_call.1} parent=223 // pred_check
            %p632 = pneg %p631
          $region226: #{tpu_custom_call.1} parent=223 // pred_check_branch
            %634 = sbr.rel (%p632) target = $region228
          $region227: #{tpu_custom_call.1} parent=223 // pred_region
            %s635 = smul.u32 %s625, 16
            %s636 = smul.u32 %s28, 56
            %s637 = sadd.s32 %s635, %s636
            %s638 = scalar_lea.vmem %s0, %s637
            %s639 = smul.u32 %s630, 24
            %s640 = sadd.s32 2, %s639
            %s641 = scalar_lea.vmem [#allocation2], %s640
            %s642 = scalar_lea.sflag [#allocation3], %s630
            %p644 = scmp.lt.u32.totalorder 18, 8
            %p645 = pneg %p644
            // Predicated region
            $region229: #{tpu_custom_call.1} parent=227 // pred_check
              _
            $region230: #{tpu_custom_call.1} parent=227 // pred_check_branch
              %647 = sbr.rel (%p644) target = $region232
            $region231: #{tpu_custom_call.1} parent=227 // pred_region
              %s662 = sand.u32 18, 7
              %p663 = scmp.eq.s32.totalorder %s662, 0
              %p664 = pneg %p663
              // Predicated region
              $region244: #{tpu_custom_call.1} parent=231 // pred_check
                _
              $region245: #{tpu_custom_call.1} parent=231 // pred_check_branch
                %666 = sbr.rel (%p663) target = $region247
              $region246: #{tpu_custom_call.1} parent=231 // pred_region
                %s667 = sand.u32 18, 7
                %s668 = ssub.s32 18, %s667
                %s669 = scalar_lea.vmem %s638, %s668
                %s670 = ssub.s32 18, %s667
                %s671 = scalar_lea.vmem %s641, %s670 [#allocation2]
                loop: start=0, step=1, limit=1
                $region248: #{tpu_custom_call.1} parent=246 // loop_pre_header
                  _
                $region249: #{tpu_custom_call.1} parent=246 // loop_header
                  %s673 = sphi 0, %s677
                  %p674 = scmp.ge.s32.totalorder %s673, 1
                  %s678 = sphi %s638, %s638
                  %s679 = sphi %s641, %s641
                $region250: #{tpu_custom_call.1} parent=246 // loop_header_branch
                  %676 = sbr.rel (%p674) target = $region254
                $region251: #{tpu_custom_call.1} parent=246 // loop_body
                  %v680 = vld [vmem:[%s678] sm:$0xff]
                  %681 = vst [vmem:[%s679] sm:$0xff] %v680
                  %v682 = vld [vmem:[%s678 + $0x8] sm:$0xff]
                  %683 = vst [vmem:[%s679 + $0x8] sm:$0xff] %v682
                $region252: #{tpu_custom_call.1} parent=246 // loop_footer
                  %s677 = sadd.s32 1, %s673
                $region253: #{tpu_custom_call.1} parent=246 // loop_footer_branch
                  %672 = sbr.rel target = $region249
                $region254: #{tpu_custom_call.1} parent=246 // loop_exit
                  _
                %s684 = sshllo.u32 0, %s667
                loop: start=0, step=1, limit=1
                $region255: #{tpu_custom_call.1} parent=246 // loop_pre_header
                  _
                $region256: #{tpu_custom_call.1} parent=246 // loop_header
                  %s686 = sphi 0, %s690
                  %p687 = scmp.ge.s32.totalorder %s686, 1
                  %s691 = sphi %s669, %s669
                  %s692 = sphi %s671, %s671
                $region257: #{tpu_custom_call.1} parent=246 // loop_header_branch
                  %689 = sbr.rel (%p687) target = $region261
                $region258: #{tpu_custom_call.1} parent=246 // loop_body
                  %v693 = vld [vmem:[%s691] sm:%s684]
                  %694 = vst [vmem:[%s692] sm:%s684] %v693
                $region259: #{tpu_custom_call.1} parent=246 // loop_footer
                  %s690 = sadd.s32 1, %s686
                $region260: #{tpu_custom_call.1} parent=246 // loop_footer_branch
                  %685 = sbr.rel target = $region256
                $region261: #{tpu_custom_call.1} parent=246 // loop_exit
                  _
              $region247: #{tpu_custom_call.1} parent=231 // pred_fallthru
                _
            $region232: #{tpu_custom_call.1} parent=227 // pred_fallthru
              _
            // Predicated region
            $region233: #{tpu_custom_call.1} parent=227 // pred_check
              %p648 = pneg %p644
            $region234: #{tpu_custom_call.1} parent=227 // pred_check_branch
              %650 = sbr.rel (%p648) target = $region236
            $region235: #{tpu_custom_call.1} parent=227 // pred_region
              %s651 = sshllo.u32 0, 18
              loop: start=0, step=1, limit=1
              $region237: #{tpu_custom_call.1} parent=235 // loop_pre_header
                _
              $region238: #{tpu_custom_call.1} parent=235 // loop_header
                %s653 = sphi 0, %s657
                %p654 = scmp.ge.s32.totalorder %s653, 1
                %s658 = sphi %s638, %s638
                %s659 = sphi %s641, %s641
              $region239: #{tpu_custom_call.1} parent=235 // loop_header_branch
                %656 = sbr.rel (%p654) target = $region243
              $region240: #{tpu_custom_call.1} parent=235 // loop_body
                %v660 = vld [vmem:[%s658] sm:%s651]
                %661 = vst [vmem:[%s659] sm:%s651] %v660
              $region241: #{tpu_custom_call.1} parent=235 // loop_footer
                %s657 = sadd.s32 1, %s653
              $region242: #{tpu_custom_call.1} parent=235 // loop_footer_branch
                %652 = sbr.rel target = $region238
              $region243: #{tpu_custom_call.1} parent=235 // loop_exit
                _
            $region236: #{tpu_custom_call.1} parent=227 // pred_fallthru
              _
            // Predicated region
            $region262: #{tpu_custom_call.1} parent=227 // pred_check
              _
            $region263: #{tpu_custom_call.1} parent=227 // pred_check_branch
              %697 = sbr.rel (0) target = $region265
            $region264: #{tpu_custom_call.1} parent=227 // pred_region
              %698 = vsyncadd %s642, 288
            $region265: #{tpu_custom_call.1} parent=227 // pred_fallthru
              _
          $region228: #{tpu_custom_call.1} parent=223 // pred_fallthru
            _
          %p699 = scmp.eq.s32.totalorder %s625, 3
          // Predicated region
          $region266: #{tpu_custom_call.1} parent=223 // pred_check
            %p700 = pneg %p699
          $region267: #{tpu_custom_call.1} parent=223 // pred_check_branch
            %702 = sbr.rel (%p700) target = $region269
          $region268: #{tpu_custom_call.1} parent=223 // pred_region
            %s703 = smul.u32 %s625, 16
            %s704 = ssub.s32 %s703, 2
            %s705 = smul.u32 %s28, 56
            %s706 = sadd.s32 %s704, %s705
            %s707 = scalar_lea.vmem %s0, %s706
            %s708 = smul.u32 %s630, 24
            %s709 = scalar_lea.vmem [#allocation2], %s708
            %s710 = scalar_lea.sflag [#allocation3], %s630
            %p712 = scmp.lt.u32.totalorder 10, 8
            %p713 = pneg %p712
            // Predicated region
            $region270: #{tpu_custom_call.1} parent=268 // pred_check
              _
            $region271: #{tpu_custom_call.1} parent=268 // pred_check_branch
              %715 = sbr.rel (%p712) target = $region273
            $region272: #{tpu_custom_call.1} parent=268 // pred_region
              %s730 = sand.u32 10, 7
              %p731 = scmp.eq.s32.totalorder %s730, 0
              %p732 = pneg %p731
              // Predicated region
              $region285: #{tpu_custom_call.1} parent=272 // pred_check
                _
              $region286: #{tpu_custom_call.1} parent=272 // pred_check_branch
                %734 = sbr.rel (%p731) target = $region288
              $region287: #{tpu_custom_call.1} parent=272 // pred_region
                %s735 = sand.u32 10, 7
                %s736 = ssub.s32 10, %s735
                %s737 = scalar_lea.vmem %s707, %s736
                %s738 = ssub.s32 10, %s735
                %s739 = scalar_lea.vmem %s709, %s738 [#allocation2]
                loop: start=0, step=1, limit=1
                $region289: #{tpu_custom_call.1} parent=287 // loop_pre_header
                  _
                $region290: #{tpu_custom_call.1} parent=287 // loop_header
                  %s741 = sphi 0, %s745
                  %p742 = scmp.ge.s32.totalorder %s741, 1
                  %s746 = sphi %s707, %s707
                  %s747 = sphi %s709, %s709
                $region291: #{tpu_custom_call.1} parent=287 // loop_header_branch
                  %744 = sbr.rel (%p742) target = $region295
                $region292: #{tpu_custom_call.1} parent=287 // loop_body
                  %v748 = vld [vmem:[%s746] sm:$0xff]
                  %749 = vst [vmem:[%s747] sm:$0xff] %v748
                $region293: #{tpu_custom_call.1} parent=287 // loop_footer
                  %s745 = sadd.s32 1, %s741
                $region294: #{tpu_custom_call.1} parent=287 // loop_footer_branch
                  %740 = sbr.rel target = $region290
                $region295: #{tpu_custom_call.1} parent=287 // loop_exit
                  _
                %s750 = sshllo.u32 0, %s735
                loop: start=0, step=1, limit=1
                $region296: #{tpu_custom_call.1} parent=287 // loop_pre_header
                  _
                $region297: #{tpu_custom_call.1} parent=287 // loop_header
                  %s752 = sphi 0, %s756
                  %p753 = scmp.ge.s32.totalorder %s752, 1
                  %s757 = sphi %s737, %s737
                  %s758 = sphi %s739, %s739
                $region298: #{tpu_custom_call.1} parent=287 // loop_header_branch
                  %755 = sbr.rel (%p753) target = $region302
                $region299: #{tpu_custom_call.1} parent=287 // loop_body
                  %v759 = vld [vmem:[%s757] sm:%s750]
                  %760 = vst [vmem:[%s758] sm:%s750] %v759
                $region300: #{tpu_custom_call.1} parent=287 // loop_footer
                  %s756 = sadd.s32 1, %s752
                $region301: #{tpu_custom_call.1} parent=287 // loop_footer_branch
                  %751 = sbr.rel target = $region297
                $region302: #{tpu_custom_call.1} parent=287 // loop_exit
                  _
              $region288: #{tpu_custom_call.1} parent=272 // pred_fallthru
                _
            $region273: #{tpu_custom_call.1} parent=268 // pred_fallthru
              _
            // Predicated region
            $region274: #{tpu_custom_call.1} parent=268 // pred_check
              %p716 = pneg %p712
            $region275: #{tpu_custom_call.1} parent=268 // pred_check_branch
              %718 = sbr.rel (%p716) target = $region277
            $region276: #{tpu_custom_call.1} parent=268 // pred_region
              %s719 = sshllo.u32 0, 10
              loop: start=0, step=1, limit=1
              $region278: #{tpu_custom_call.1} parent=276 // loop_pre_header
                _
              $region279: #{tpu_custom_call.1} parent=276 // loop_header
                %s721 = sphi 0, %s725
                %p722 = scmp.ge.s32.totalorder %s721, 1
                %s726 = sphi %s707, %s707
                %s727 = sphi %s709, %s709
              $region280: #{tpu_custom_call.1} parent=276 // loop_header_branch
                %724 = sbr.rel (%p722) target = $region284
              $region281: #{tpu_custom_call.1} parent=276 // loop_body
                %v728 = vld [vmem:[%s726] sm:%s719]
                %729 = vst [vmem:[%s727] sm:%s719] %v728
              $region282: #{tpu_custom_call.1} parent=276 // loop_footer
                %s725 = sadd.s32 1, %s721
              $region283: #{tpu_custom_call.1} parent=276 // loop_footer_branch
                %720 = sbr.rel target = $region279
              $region284: #{tpu_custom_call.1} parent=276 // loop_exit
                _
            $region277: #{tpu_custom_call.1} parent=268 // pred_fallthru
              _
            // Predicated region
            $region303: #{tpu_custom_call.1} parent=268 // pred_check
              _
            $region304: #{tpu_custom_call.1} parent=268 // pred_check_branch
              %763 = sbr.rel (0) target = $region306
            $region305: #{tpu_custom_call.1} parent=268 // pred_region
              %764 = vsyncadd %s710, 160
            $region306: #{tpu_custom_call.1} parent=268 // pred_fallthru
              _
          $region269: #{tpu_custom_call.1} parent=223 // pred_fallthru
            _
          %p765 = scmp.eq.s32.totalorder %s625, 2
          // Predicated region
          $region307: #{tpu_custom_call.1} parent=223 // pred_check
            %p766 = pneg %p765
          $region308: #{tpu_custom_call.1} parent=223 // pred_check_branch
            %768 = sbr.rel (%p766) target = $region310
          $region309: #{tpu_custom_call.1} parent=223 // pred_region
            %s769 = smul.u32 %s625, 16
            %s770 = ssub.s32 %s769, 2
            %s771 = smul.u32 %s28, 56
            %s772 = sadd.s32 %s770, %s771
            %s773 = scalar_lea.vmem %s0, %s772
            %s774 = smul.u32 %s630, 24
            %s775 = scalar_lea.vmem [#allocation2], %s774
            %s776 = scalar_lea.sflag [#allocation3], %s630
            %p778 = scmp.lt.u32.totalorder 20, 8
            %p779 = pneg %p778
            // Predicated region
            $region311: #{tpu_custom_call.1} parent=309 // pred_check
              _
            $region312: #{tpu_custom_call.1} parent=309 // pred_check_branch
              %781 = sbr.rel (%p778) target = $region314
            $region313: #{tpu_custom_call.1} parent=309 // pred_region
              %s796 = sand.u32 20, 7
              %p797 = scmp.eq.s32.totalorder %s796, 0
              %p798 = pneg %p797
              // Predicated region
              $region326: #{tpu_custom_call.1} parent=313 // pred_check
                _
              $region327: #{tpu_custom_call.1} parent=313 // pred_check_branch
                %800 = sbr.rel (%p797) target = $region329
              $region328: #{tpu_custom_call.1} parent=313 // pred_region
                %s801 = sand.u32 20, 7
                %s802 = ssub.s32 20, %s801
                %s803 = scalar_lea.vmem %s773, %s802
                %s804 = ssub.s32 20, %s801
                %s805 = scalar_lea.vmem %s775, %s804 [#allocation2]
                loop: start=0, step=1, limit=1
                $region330: #{tpu_custom_call.1} parent=328 // loop_pre_header
                  _
                $region331: #{tpu_custom_call.1} parent=328 // loop_header
                  %s807 = sphi 0, %s811
                  %p808 = scmp.ge.s32.totalorder %s807, 1
                  %s812 = sphi %s773, %s773
                  %s813 = sphi %s775, %s775
                $region332: #{tpu_custom_call.1} parent=328 // loop_header_branch
                  %810 = sbr.rel (%p808) target = $region336
                $region333: #{tpu_custom_call.1} parent=328 // loop_body
                  %v814 = vld [vmem:[%s812] sm:$0xff]
                  %815 = vst [vmem:[%s813] sm:$0xff] %v814
                  %v816 = vld [vmem:[%s812 + $0x8] sm:$0xff]
                  %817 = vst [vmem:[%s813 + $0x8] sm:$0xff] %v816
                $region334: #{tpu_custom_call.1} parent=328 // loop_footer
                  %s811 = sadd.s32 1, %s807
                $region335: #{tpu_custom_call.1} parent=328 // loop_footer_branch
                  %806 = sbr.rel target = $region331
                $region336: #{tpu_custom_call.1} parent=328 // loop_exit
                  _
                %s818 = sshllo.u32 0, %s801
                loop: start=0, step=1, limit=1
                $region337: #{tpu_custom_call.1} parent=328 // loop_pre_header
                  _
                $region338: #{tpu_custom_call.1} parent=328 // loop_header
                  %s820 = sphi 0, %s824
                  %p821 = scmp.ge.s32.totalorder %s820, 1
                  %s825 = sphi %s803, %s803
                  %s826 = sphi %s805, %s805
                $region339: #{tpu_custom_call.1} parent=328 // loop_header_branch
                  %823 = sbr.rel (%p821) target = $region343
                $region340: #{tpu_custom_call.1} parent=328 // loop_body
                  %v827 = vld [vmem:[%s825] sm:%s818]
                  %828 = vst [vmem:[%s826] sm:%s818] %v827
                $region341: #{tpu_custom_call.1} parent=328 // loop_footer
                  %s824 = sadd.s32 1, %s820
                $region342: #{tpu_custom_call.1} parent=328 // loop_footer_branch
                  %819 = sbr.rel target = $region338
                $region343: #{tpu_custom_call.1} parent=328 // loop_exit
                  _
              $region329: #{tpu_custom_call.1} parent=313 // pred_fallthru
                _
            $region314: #{tpu_custom_call.1} parent=309 // pred_fallthru
              _
            // Predicated region
            $region315: #{tpu_custom_call.1} parent=309 // pred_check
              %p782 = pneg %p778
            $region316: #{tpu_custom_call.1} parent=309 // pred_check_branch
              %784 = sbr.rel (%p782) target = $region318
            $region317: #{tpu_custom_call.1} parent=309 // pred_region
              %s785 = sshllo.u32 0, 20
              loop: start=0, step=1, limit=1
              $region319: #{tpu_custom_call.1} parent=317 // loop_pre_header
                _
              $region320: #{tpu_custom_call.1} parent=317 // loop_header
                %s787 = sphi 0, %s791
                %p788 = scmp.ge.s32.totalorder %s787, 1
                %s792 = sphi %s773, %s773
                %s793 = sphi %s775, %s775
              $region321: #{tpu_custom_call.1} parent=317 // loop_header_branch
                %790 = sbr.rel (%p788) target = $region325
              $region322: #{tpu_custom_call.1} parent=317 // loop_body
                %v794 = vld [vmem:[%s792] sm:%s785]
                %795 = vst [vmem:[%s793] sm:%s785] %v794
              $region323: #{tpu_custom_call.1} parent=317 // loop_footer
                %s791 = sadd.s32 1, %s787
              $region324: #{tpu_custom_call.1} parent=317 // loop_footer_branch
                %786 = sbr.rel target = $region320
              $region325: #{tpu_custom_call.1} parent=317 // loop_exit
                _
            $region318: #{tpu_custom_call.1} parent=309 // pred_fallthru
              _
            // Predicated region
            $region344: #{tpu_custom_call.1} parent=309 // pred_check
              _
            $region345: #{tpu_custom_call.1} parent=309 // pred_check_branch
              %831 = sbr.rel (0) target = $region347
            $region346: #{tpu_custom_call.1} parent=309 // pred_region
              %832 = vsyncadd %s776, 320
            $region347: #{tpu_custom_call.1} parent=309 // pred_fallthru
              _
          $region310: #{tpu_custom_call.1} parent=223 // pred_fallthru
            _
          %p833 = scmp.ge.s32.totalorder %s625, 1
          %p834 = scmp.le.s32.totalorder %s625, 1
          %p835 = pnand %p833, %p834
          %p836 = pneg %p835
          // Predicated region
          $region348: #{tpu_custom_call.1} parent=223 // pred_check
            _
          $region349: #{tpu_custom_call.1} parent=223 // pred_check_branch
            %838 = sbr.rel (%p835) target = $region351
          $region350: #{tpu_custom_call.1} parent=223 // pred_region
            %s839 = smul.u32 %s625, 16
            %s840 = ssub.s32 %s839, 2
            %s841 = smul.u32 %s28, 56
            %s842 = sadd.s32 %s840, %s841
            %s843 = scalar_lea.vmem %s0, %s842
            %s844 = smul.u32 %s630, 24
            %s845 = scalar_lea.vmem [#allocation2], %s844
            %s846 = scalar_lea.sflag [#allocation3], %s630
            %p848 = scmp.lt.u32.totalorder 20, 8
            %p849 = pneg %p848
            // Predicated region
            $region352: #{tpu_custom_call.1} parent=350 // pred_check
              _
            $region353: #{tpu_custom_call.1} parent=350 // pred_check_branch
              %851 = sbr.rel (%p848) target = $region355
            $region354: #{tpu_custom_call.1} parent=350 // pred_region
              %s866 = sand.u32 20, 7
              %p867 = scmp.eq.s32.totalorder %s866, 0
              %p868 = pneg %p867
              // Predicated region
              $region367: #{tpu_custom_call.1} parent=354 // pred_check
                _
              $region368: #{tpu_custom_call.1} parent=354 // pred_check_branch
                %870 = sbr.rel (%p867) target = $region370
              $region369: #{tpu_custom_call.1} parent=354 // pred_region
                %s871 = sand.u32 20, 7
                %s872 = ssub.s32 20, %s871
                %s873 = scalar_lea.vmem %s843, %s872
                %s874 = ssub.s32 20, %s871
                %s875 = scalar_lea.vmem %s845, %s874 [#allocation2]
                loop: start=0, step=1, limit=1
                $region371: #{tpu_custom_call.1} parent=369 // loop_pre_header
                  _
                $region372: #{tpu_custom_call.1} parent=369 // loop_header
                  %s877 = sphi 0, %s881
                  %p878 = scmp.ge.s32.totalorder %s877, 1
                  %s882 = sphi %s843, %s843
                  %s883 = sphi %s845, %s845
                $region373: #{tpu_custom_call.1} parent=369 // loop_header_branch
                  %880 = sbr.rel (%p878) target = $region377
                $region374: #{tpu_custom_call.1} parent=369 // loop_body
                  %v884 = vld [vmem:[%s882] sm:$0xff]
                  %885 = vst [vmem:[%s883] sm:$0xff] %v884
                  %v886 = vld [vmem:[%s882 + $0x8] sm:$0xff]
                  %887 = vst [vmem:[%s883 + $0x8] sm:$0xff] %v886
                $region375: #{tpu_custom_call.1} parent=369 // loop_footer
                  %s881 = sadd.s32 1, %s877
                $region376: #{tpu_custom_call.1} parent=369 // loop_footer_branch
                  %876 = sbr.rel target = $region372
                $region377: #{tpu_custom_call.1} parent=369 // loop_exit
                  _
                %s888 = sshllo.u32 0, %s871
                loop: start=0, step=1, limit=1
                $region378: #{tpu_custom_call.1} parent=369 // loop_pre_header
                  _
                $region379: #{tpu_custom_call.1} parent=369 // loop_header
                  %s890 = sphi 0, %s894
                  %p891 = scmp.ge.s32.totalorder %s890, 1
                  %s895 = sphi %s873, %s873
                  %s896 = sphi %s875, %s875
                $region380: #{tpu_custom_call.1} parent=369 // loop_header_branch
                  %893 = sbr.rel (%p891) target = $region384
                $region381: #{tpu_custom_call.1} parent=369 // loop_body
                  %v897 = vld [vmem:[%s895] sm:%s888]
                  %898 = vst [vmem:[%s896] sm:%s888] %v897
                $region382: #{tpu_custom_call.1} parent=369 // loop_footer
                  %s894 = sadd.s32 1, %s890
                $region383: #{tpu_custom_call.1} parent=369 // loop_footer_branch
                  %889 = sbr.rel target = $region379
                $region384: #{tpu_custom_call.1} parent=369 // loop_exit
                  _
              $region370: #{tpu_custom_call.1} parent=354 // pred_fallthru
                _
            $region355: #{tpu_custom_call.1} parent=350 // pred_fallthru
              _
            // Predicated region
            $region356: #{tpu_custom_call.1} parent=350 // pred_check
              %p852 = pneg %p848
            $region357: #{tpu_custom_call.1} parent=350 // pred_check_branch
              %854 = sbr.rel (%p852) target = $region359
            $region358: #{tpu_custom_call.1} parent=350 // pred_region
              %s855 = sshllo.u32 0, 20
              loop: start=0, step=1, limit=1
              $region360: #{tpu_custom_call.1} parent=358 // loop_pre_header
                _
              $region361: #{tpu_custom_call.1} parent=358 // loop_header
                %s857 = sphi 0, %s861
                %p858 = scmp.ge.s32.totalorder %s857, 1
                %s862 = sphi %s843, %s843
                %s863 = sphi %s845, %s845
              $region362: #{tpu_custom_call.1} parent=358 // loop_header_branch
                %860 = sbr.rel (%p858) target = $region366
              $region363: #{tpu_custom_call.1} parent=358 // loop_body
                %v864 = vld [vmem:[%s862] sm:%s855]
                %865 = vst [vmem:[%s863] sm:%s855] %v864
              $region364: #{tpu_custom_call.1} parent=358 // loop_footer
                %s861 = sadd.s32 1, %s857
              $region365: #{tpu_custom_call.1} parent=358 // loop_footer_branch
                %856 = sbr.rel target = $region361
              $region366: #{tpu_custom_call.1} parent=358 // loop_exit
                _
            $region359: #{tpu_custom_call.1} parent=350 // pred_fallthru
              _
            // Predicated region
            $region385: #{tpu_custom_call.1} parent=350 // pred_check
              _
            $region386: #{tpu_custom_call.1} parent=350 // pred_check_branch
              %901 = sbr.rel (0) target = $region388
            $region387: #{tpu_custom_call.1} parent=350 // pred_region
              %902 = vsyncadd %s846, 320
            $region388: #{tpu_custom_call.1} parent=350 // pred_fallthru
              _
          $region351: #{tpu_custom_call.1} parent=223 // pred_fallthru
            _
        $region224: #{tpu_custom_call.1} parent=47 // pred_fallthru
          _
        %v903 = vld [vmem:[%s347] sm:$0xff]
        %v904 = vld [vmem:[%s347 + $0x8] sm:$0xff]
        %v905 = vld [vmem:[%s5] sm:$0xff]
        %v906 = vld [vmem:[%s5 + $0x8] sm:$0xff]
        %v907 = vld [vmem:[%s5 + $0x10] sm:$0xff]
        %v908 = vld [vmem:[%s5 + $0x18] sm:$0xff]
        %v909 = vld [vmem:[%s4] sm:$0x3]
        %v911 = vlaneseq
        %v912 = vshrl.u32 %v911, 7
        %v913 = vsub.s32 0, %v912
        %v914 = vrot.slane %v909, %v913
        %v915 = vlaneseq
        %v916 = vshrl.u32 %v915, 7
        %v917 = vsub.s32 1, %v916
        %v918 = vrot.slane %v909, %v917
        %vm921 = vcmask 130048
        %v923 = vsel %vm921, %v903, 0
        %v926 = vsel %vm921, %v904, 0
        %928 = vmatprep.subr.mxu0 %v906
        %929 = vmatpush1.msra.mxu0 %v905
        %930 = vmatprep.subr.mxu0 %v908
        %931 = vmatpush1.msra.mxu0 %v907
        %932 = vmatprep.subr.mxu0 0.0
        %933 = vmatpush1.msra.mxu0 0.0
        %934 = vmatprep.subr.mxu0 0.0
        %935 = vmatpush1.msra.mxu0 0.0
        %936 = vmatprep.subr.mxu0 0.0
        %937 = vmatpush1.msra.mxu0 0.0
        %938 = vmatprep.subr.mxu0 0.0
        %939 = vmatpush1.msra.mxu0 0.0
        %940 = vmatprep.subr.mxu0 0.0
        %941 = vmatpush1.msra.mxu0 0.0
        %942 = vmatprep.subr.mxu0 0.0
        %943 = vmatpush1.msra.mxu0 0.0
        %944 = vmatprep.subr.mxu0 0.0
        %945 = vmatpush1.msra.mxu0 0.0
        %946 = vmatprep.subr.mxu0 0.0
        %947 = vmatpush1.msra.mxu0 0.0
        %948 = vmatprep.subr.mxu0 0.0
        %949 = vmatpush1.msra.mxu0 0.0
        %950 = vmatprep.subr.mxu0 0.0
        %951 = vmatpush1.msra.mxu0 0.0
        %952 = vmatprep.subr.mxu0 0.0
        %953 = vmatpush1.msra.mxu0 0.0
        %954 = vmatprep.subr.mxu0 0.0
        %955 = vmatpush1.msra.mxu0 0.0
        %956 = vmatprep.subr.mxu0 0.0
        %957 = vmatpush1.msra.mxu0 0.0
        %958 = vmatprep.subr.mxu0 0.0
        %959 = vmatpush1.msra.mxu0 0.0
        %960 = vmatprep.subr.mxu0 0.0
        %961 = vmatpush1.msra.mxu0 0.0
        %962 = vmatprep.subr.mxu0 0.0
        %963 = vmatpush1.msra.mxu0 0.0
        %964 = vmatprep.subr.mxu0 0.0
        %965 = vmatpush1.msra.mxu0 0.0
        %966 = vmatprep.subr.mxu0 0.0
        %967 = vmatpush1.msra.mxu0 0.0
        %968 = vmatprep.subr.mxu0 0.0
        %969 = vmatpush1.msra.mxu0 0.0
        %970 = vmatprep.subr.mxu0 0.0
        %971 = vmatpush1.msra.mxu0 0.0
        %972 = vmatprep.subr.mxu0 0.0
        %973 = vmatpush1.msra.mxu0 0.0
        %974 = vmatprep.subr.mxu0 0.0
        %975 = vmatpush1.msra.mxu0 0.0
        %976 = vmatprep.subr.mxu0 0.0
        %977 = vmatpush1.msra.mxu0 0.0
        %978 = vmatprep.subr.mxu0 0.0
        %979 = vmatpush1.msra.mxu0 0.0
        %980 = vmatprep.subr.mxu0 0.0
        %981 = vmatpush1.msra.mxu0 0.0
        %982 = vmatprep.subr.mxu0 0.0
        %983 = vmatpush1.msra.mxu0 0.0
        %984 = vmatprep.subr.mxu0 0.0
        %985 = vmatpush1.msra.mxu0 0.0
        %986 = vmatprep.subr.mxu0 0.0
        %987 = vmatpush1.msra.mxu0 0.0
        %988 = vmatprep.subr.mxu0 0.0
        %989 = vmatpush1.msra.mxu0 0.0
        %990 = vmatprep.subr.mxu0 0.0
        %991 = vmatpush1.msra.mxu0 0.0
        %992 = vmatprep.mubr.f32.mxu0 0.0
        %993 = vmatmul.mubr.f32.gmra.mrb[0].mxu0 %v923
        %v994 = vpop.f32.mrb[0].mxu0
        %v995 = vadd.f32 %v914, %v994
        %v996 = vpop.f32.mrb[0].mxu0
        %v997 = vadd.f32 %v918, %v996
        %998 = vmatprep.mubr.f32.mxu0 0.0
        %999 = vmatmul.mubr.f32.gmra.mrb[0].mxu0 %v926
        %v1000 = vpop.f32.mrb[0].mxu0
        %v1001 = vadd.f32 %v914, %v1000
        %v1002 = vpop.f32.mrb[0].mxu0
        %v1003 = vadd.f32 %v918, %v1002
        %1004 = vdwg.mxu0
        // Predicated region
        $region389: #{tpu_custom_call.1} parent=47 // pred_check
          %p1005 = pneg %p365
        $region390: #{tpu_custom_call.1} parent=47 // pred_check_branch
          %1007 = sbr.rel (%p1005) target = $region392
        $region391: #{tpu_custom_call.1} parent=47 // pred_region
          %s1008 = scalar_lea.sflag [#allocation3], %s364
          %s1009 = smul.u32 18, 1
          %s1010 = sshll.u32 %s1009, 4
          %1011 = dma.done %s1008, %s1010
        $region392: #{tpu_custom_call.1} parent=47 // pred_fallthru
          _
        %p1012 = scmp.eq.s32.totalorder %s29, 3
        // Predicated region
        $region393: #{tpu_custom_call.1} parent=47 // pred_check
          %p1013 = pneg %p1012
        $region394: #{tpu_custom_call.1} parent=47 // pred_check_branch
          %1015 = sbr.rel (%p1013) target = $region396
        $region395: #{tpu_custom_call.1} parent=47 // pred_region
          %s1016 = scalar_lea.sflag [#allocation3], %s364
          %s1017 = smul.u32 10, 1
          %s1018 = sshll.u32 %s1017, 4
          %1019 = dma.done %s1016, %s1018
        $region396: #{tpu_custom_call.1} parent=47 // pred_fallthru
          _
        %p1020 = scmp.eq.s32.totalorder %s29, 2
        // Predicated region
        $region397: #{tpu_custom_call.1} parent=47 // pred_check
          %p1021 = pneg %p1020
        $region398: #{tpu_custom_call.1} parent=47 // pred_check_branch
          %1023 = sbr.rel (%p1021) target = $region400
        $region399: #{tpu_custom_call.1} parent=47 // pred_region
          %s1024 = scalar_lea.sflag [#allocation3], %s364
          %s1025 = smul.u32 20, 1
          %s1026 = sshll.u32 %s1025, 4
          %1027 = dma.done %s1024, %s1026
        $region400: #{tpu_custom_call.1} parent=47 // pred_fallthru
          _
        %p1028 = scmp.ge.s32.totalorder %s29, 1
        %p1029 = scmp.le.s32.totalorder %s29, 1
        %p1030 = pnand %p1028, %p1029
        %p1031 = pneg %p1030
        // Predicated region
        $region401: #{tpu_custom_call.1} parent=47 // pred_check
          _
        $region402: #{tpu_custom_call.1} parent=47 // pred_check_branch
          %1033 = sbr.rel (%p1030) target = $region404
        $region403: #{tpu_custom_call.1} parent=47 // pred_region
          %s1034 = scalar_lea.sflag [#allocation3], %s364
          %s1035 = smul.u32 20, 1
          %s1036 = sshll.u32 %s1035, 4
          %1037 = dma.done %s1034, %s1036
        $region404: #{tpu_custom_call.1} parent=47 // pred_fallthru
          _
        %s1038 = smul.u32 %s29, 16
        %s1039 = ssub.s32 %s1038, 2
        %v1040 = vlaneseq
        %v1041 = vshrl.u32 %v1040, 7
        %v1042 = vadd.s32 %v1041, 8
        %v1043 = vadd.s32 %v1041, 16
        %v1044 = vstv %s1039
        %v1045 = vadd.s32 %v1044, %v1041
        %v1046 = vadd.s32 %v1044, %v1042
        %v1047 = vadd.s32 %v1044, %v1043
        %vm1048 = vcmp.ge.s32.totalorder %v1045, 0
        %vm1049 = vcmp.ge.s32.totalorder %v1046, 0
        %vm1050 = vcmp.ge.s32.totalorder %v1047, 0
        %vm1051 = vcmp.lt.s32.totalorder %v1045, 56
        %vm1052 = vcmp.lt.s32.totalorder %v1046, 56
        %vm1053 = vcmp.lt.s32.totalorder %v1047, 56
        %vm1054 = vmand %vm1048, %vm1051
        %vm1055 = vmand %vm1049, %vm1052
        %vm1056 = vmand %vm1050, %vm1053
        %s1057 = smul.u32 %s364, 24
        %s1058 = scalar_lea.vmem [#allocation2], %s1057
        %v1059 = vld [vmem:[%s1058] sm:$0xff]
        %v1060 = vld [vmem:[%s1058 + $0x8] sm:$0xff]
        %v1061 = vld [vmem:[%s1058 + $0x10] sm:$0xf]
        %v1062 = vld [vmem:[%s351] sm:$0x1]
        %v1064 = vlaneseq
        %v1065 = vshrl.u32 %v1064, 7
        %v1066 = vsub.s32 0, %v1065
        %v1067 = vrot.slane %v1062, %v1066
        %v1069 = vadd.f32 %v1059, %v1067
        %v1070 = vadd.f32 %v1060, %v1067
        %v1071 = vadd.f32 %v1061, %v1067
        %v1072 = vsel %vm1054, 1, 0
        %v1073 = vsel %vm1055, 1, 0
        %v1074 = vsel %vm1056, 1, 0
        %vm1075 = vcmp.eq.s32.totalorder %v1072, 1
        %vm1076 = vcmp.eq.s32.totalorder %v1073, 1
        %vm1077 = vcmp.eq.s32.totalorder %v1074, 1
        %v1078 = vsel %vm1075, %v1069, 0.0
        %v1079 = vsel %vm1076, %v1070, 0.0
        %v1080 = vsel %vm1077, %v1071, 0.0
        %vm1084 = vcmask 1045504
        %v1085 = vrot.slane %v1078, 2
        %v1086 = vrot.slane %v1079, 2
        %v1087 = vsel %vm1084, %v1085, %v1086
        %v1088 = vrot.slane %v1080, 2
        %v1089 = vsel %vm1084, %v1086, %v1088
        %vm1092 = vcmask 1043456
        %v1093 = vrot.slane %v1078, 4
        %v1094 = vrot.slane %v1079, 4
        %v1095 = vsel %vm1092, %v1093, %v1094
        %v1096 = vrot.slane %v1080, 4
        %v1097 = vsel %vm1092, %v1094, %v1096
        %v1100 = vld [vmem:[#allocation4] sm:$0xff]
        %v1101 = vld [vmem:[#allocation4 + $0x8] sm:$0xff]
        %v1102 = vld [vmem:[#allocation4 + $0x10] sm:$0xff]
        %v1103 = vld [vmem:[#allocation4 + $0x18] sm:$0xff]
        %v1104 = vld [vmem:[#allocation4 + $0x20] sm:$0xff]
        %v1105 = vld [vmem:[#allocation4 + $0x28] sm:$0xff]
        %v1106 = vld [vmem:[#allocation4 + $0x30] sm:$0xff]
        %v1107 = vld [vmem:[#allocation4 + $0x38] sm:$0xff]
        %v1108 = vld [vmem:[#allocation4 + $0x40] sm:$0xff]
        %v1109 = vld [vmem:[#allocation4 + $0x48] sm:$0xff]
        %v1110 = vld [vmem:[#allocation4 + $0x50] sm:$0xff]
        %v1111 = vld [vmem:[#allocation4 + $0x58] sm:$0xff]
        %v1112 = vld [vmem:[#allocation4 + $0x60] sm:$0xff]
        %v1113 = vld [vmem:[#allocation4 + $0x68] sm:$0xff]
        %v1114 = vld [vmem:[#allocation4 + $0x70] sm:$0xff]
        %v1115 = vld [vmem:[#allocation4 + $0x78] sm:$0xff]
        %v1116 = vld [vmem:[#allocation4 + $0x80] sm:$0xff]
        %v1117 = vld [vmem:[#allocation4 + $0x88] sm:$0xff]
        %v1118 = vld [vmem:[#allocation4 + $0x90] sm:$0xff]
        %v1119 = vld [vmem:[#allocation4 + $0x98] sm:$0xff]
        %v1120 = vld [vmem:[#allocation4 + $0xa0] sm:$0xff]
        %v1121 = vld [vmem:[#allocation4 + $0xa8] sm:$0xff]
        %v1122 = vld [vmem:[#allocation4 + $0xb0] sm:$0xff]
        %v1123 = vld [vmem:[#allocation4 + $0xb8] sm:$0xff]
        %v1124 = vld [vmem:[#allocation4 + $0xc0] sm:$0xff]
        %v1125 = vld [vmem:[#allocation4 + $0xc8] sm:$0xff]
        %v1126 = vld [vmem:[#allocation4 + $0xd0] sm:$0xff]
        %v1127 = vld [vmem:[#allocation4 + $0xd8] sm:$0xff]
        %v1128 = vld [vmem:[#allocation4 + $0xe0] sm:$0xff]
        %v1129 = vld [vmem:[#allocation4 + $0xe8] sm:$0xff]
        %v1130 = vld [vmem:[#allocation4 + $0xf0] sm:$0xff]
        %v1131 = vld [vmem:[#allocation4 + $0xf8] sm:$0xff]
        %v1132 = vld [vmem:[#allocation4 + $0x100] sm:$0xff]
        %v1133 = vld [vmem:[#allocation4 + $0x108] sm:$0xff]
        %v1134 = vld [vmem:[#allocation4 + $0x110] sm:$0xff]
        %v1135 = vld [vmem:[#allocation4 + $0x118] sm:$0xff]
        %v1136 = vld [vmem:[#allocation4 + $0x120] sm:$0xff]
        %v1137 = vld [vmem:[#allocation4 + $0x128] sm:$0xff]
        %v1138 = vld [vmem:[#allocation4 + $0x130] sm:$0xff]
        %v1139 = vld [vmem:[#allocation4 + $0x138] sm:$0xff]
        %v1140 = vld [vmem:[#allocation4 + $0x140] sm:$0xff]
        %v1141 = vld [vmem:[#allocation4 + $0x148] sm:$0xff]
        %v1142 = vld [vmem:[#allocation4 + $0x150] sm:$0xff]
        %v1143 = vld [vmem:[#allocation4 + $0x158] sm:$0xff]
        %v1144 = vld [vmem:[#allocation4 + $0x160] sm:$0xff]
        %v1145 = vld [vmem:[#allocation4 + $0x168] sm:$0xff]
        %v1146 = vld [vmem:[#allocation4 + $0x170] sm:$0xff]
        %v1147 = vld [vmem:[#allocation4 + $0x178] sm:$0xff]
        %v1148 = vld [vmem:[#allocation4 + $0x180] sm:$0xff]
        %v1149 = vld [vmem:[#allocation4 + $0x188] sm:$0xff]
        %v1150 = vld [vmem:[#allocation4 + $0x190] sm:$0xff]
        %v1151 = vld [vmem:[#allocation4 + $0x198] sm:$0xff]
        %v1152 = vld [vmem:[#allocation4 + $0x1a0] sm:$0xff]
        %v1153 = vld [vmem:[#allocation4 + $0x1a8] sm:$0xff]
        %v1154 = vld [vmem:[#allocation4 + $0x1b0] sm:$0xff]
        %v1155 = vld [vmem:[#allocation4 + $0x1b8] sm:$0xff]
        %v1156 = vld [vmem:[#allocation4 + $0x1c0] sm:$0xff]
        %v1157 = vld [vmem:[#allocation4 + $0x1c8] sm:$0xff]
        %v1158 = vld [vmem:[#allocation4 + $0x1d0] sm:$0xff]
        %v1159 = vld [vmem:[#allocation4 + $0x1d8] sm:$0xff]
        %v1160 = vld [vmem:[#allocation4 + $0x1e0] sm:$0xff]
        %v1161 = vld [vmem:[#allocation4 + $0x1e8] sm:$0xff]
        %v1162 = vld [vmem:[#allocation4 + $0x1f0] sm:$0xff]
        %v1163 = vld [vmem:[#allocation4 + $0x1f8] sm:$0xff]
        %v1164 = vld [vmem:[#allocation4 + $0x200] sm:$0xff]
        %v1165 = vld [vmem:[#allocation4 + $0x208] sm:$0xff]
        %v1166 = vld [vmem:[#allocation4 + $0x210] sm:$0xff]
        %v1167 = vld [vmem:[#allocation4 + $0x218] sm:$0xff]
        %v1168 = vld [vmem:[#allocation4 + $0x220] sm:$0xff]
        %v1169 = vld [vmem:[#allocation4 + $0x228] sm:$0xff]
        %v1170 = vld [vmem:[#allocation4 + $0x230] sm:$0xff]
        %v1171 = vld [vmem:[#allocation4 + $0x238] sm:$0xff]
        %v1172 = vld [vmem:[#allocation4 + $0x240] sm:$0xff]
        %v1173 = vld [vmem:[#allocation4 + $0x248] sm:$0xff]
        %v1174 = vld [vmem:[#allocation4 + $0x250] sm:$0xff]
        %v1175 = vld [vmem:[#allocation4 + $0x258] sm:$0xff]
        %v1176 = vld [vmem:[#allocation4 + $0x260] sm:$0xff]
        %v1177 = vld [vmem:[#allocation4 + $0x268] sm:$0xff]
        %v1178 = vld [vmem:[#allocation4 + $0x270] sm:$0xff]
        %v1179 = vld [vmem:[#allocation4 + $0x278] sm:$0xff]
        %v1180 = vld [vmem:[#allocation4 + $0x280] sm:$0xff]
        %v1181 = vld [vmem:[#allocation4 + $0x288] sm:$0xff]
        %v1182 = vld [vmem:[#allocation4 + $0x290] sm:$0xff]
        %v1183 = vld [vmem:[#allocation4 + $0x298] sm:$0xff]
        %v1184 = vld [vmem:[#allocation4 + $0x2a0] sm:$0xff]
        %v1185 = vld [vmem:[#allocation4 + $0x2a8] sm:$0xff]
        %v1186 = vld [vmem:[#allocation4 + $0x2b0] sm:$0xff]
        %v1187 = vld [vmem:[#allocation4 + $0x2b8] sm:$0xff]
        %v1188 = vld [vmem:[#allocation4 + $0x2c0] sm:$0xff]
        %v1189 = vld [vmem:[#allocation4 + $0x2c8] sm:$0xff]
        %v1190 = vld [vmem:[#allocation4 + $0x2d0] sm:$0xff]
        %v1191 = vld [vmem:[#allocation4 + $0x2d8] sm:$0xff]
        %v1192 = vld [vmem:[#allocation4 + $0x2e0] sm:$0xff]
        %v1193 = vld [vmem:[#allocation4 + $0x2e8] sm:$0xff]
        %v1194 = vld [vmem:[#allocation4 + $0x2f0] sm:$0xff]
        %v1195 = vld [vmem:[#allocation4 + $0x2f8] sm:$0xff]
        %1196 = vmatprep.subr.mxu0 %v1101
        %1197 = vmatpush1.msra.mxu0 %v1100
        %1198 = vmatprep.subr.mxu0 %v1103
        %1199 = vmatpush1.msra.mxu0 %v1102
        %1200 = vmatprep.subr.mxu0 %v1105
        %1201 = vmatpush1.msra.mxu0 %v1104
        %1202 = vmatprep.subr.mxu0 %v1107
        %1203 = vmatpush1.msra.mxu0 %v1106
        %1204 = vmatprep.subr.mxu0 %v1109
        %1205 = vmatpush1.msra.mxu0 %v1108
        %1206 = vmatprep.subr.mxu0 %v1111
        %1207 = vmatpush1.msra.mxu0 %v1110
        %1208 = vmatprep.subr.mxu0 %v1113
        %1209 = vmatpush1.msra.mxu0 %v1112
        %1210 = vmatprep.subr.mxu0 %v1115
        %1211 = vmatpush1.msra.mxu0 %v1114
        %1212 = vmatprep.subr.mxu0 %v1117
        %1213 = vmatpush1.msra.mxu0 %v1116
        %1214 = vmatprep.subr.mxu0 %v1119
        %1215 = vmatpush1.msra.mxu0 %v1118
        %1216 = vmatprep.subr.mxu0 %v1121
        %1217 = vmatpush1.msra.mxu0 %v1120
        %1218 = vmatprep.subr.mxu0 %v1123
        %1219 = vmatpush1.msra.mxu0 %v1122
        %1220 = vmatprep.subr.mxu0 %v1125
        %1221 = vmatpush1.msra.mxu0 %v1124
        %1222 = vmatprep.subr.mxu0 %v1127
        %1223 = vmatpush1.msra.mxu0 %v1126
        %1224 = vmatprep.subr.mxu0 %v1129
        %1225 = vmatpush1.msra.mxu0 %v1128
        %1226 = vmatprep.subr.mxu0 %v1131
        %1227 = vmatpush1.msra.mxu0 %v1130
        %1228 = vmatprep.subr.mxu0 %v1133
        %1229 = vmatpush1.msra.mxu0 %v1132
        %1230 = vmatprep.subr.mxu0 %v1135
        %1231 = vmatpush1.msra.mxu0 %v1134
        %1232 = vmatprep.subr.mxu0 %v1137
        %1233 = vmatpush1.msra.mxu0 %v1136
        %1234 = vmatprep.subr.mxu0 %v1139
        %1235 = vmatpush1.msra.mxu0 %v1138
        %1236 = vmatprep.subr.mxu0 %v1141
        %1237 = vmatpush1.msra.mxu0 %v1140
        %1238 = vmatprep.subr.mxu0 %v1143
        %1239 = vmatpush1.msra.mxu0 %v1142
        %1240 = vmatprep.subr.mxu0 %v1145
        %1241 = vmatpush1.msra.mxu0 %v1144
        %1242 = vmatprep.subr.mxu0 %v1147
        %1243 = vmatpush1.msra.mxu0 %v1146
        %1244 = vmatprep.subr.mxu0 %v1149
        %1245 = vmatpush1.msra.mxu0 %v1148
        %1246 = vmatprep.subr.mxu0 %v1151
        %1247 = vmatpush1.msra.mxu0 %v1150
        %1248 = vmatprep.subr.mxu0 %v1153
        %1249 = vmatpush1.msra.mxu0 %v1152
        %1250 = vmatprep.subr.mxu0 %v1155
        %1251 = vmatpush1.msra.mxu0 %v1154
        %1252 = vmatprep.subr.mxu0 %v1157
        %1253 = vmatpush1.msra.mxu0 %v1156
        %1254 = vmatprep.subr.mxu0 %v1159
        %1255 = vmatpush1.msra.mxu0 %v1158
        %1256 = vmatprep.subr.mxu0 %v1161
        %1257 = vmatpush1.msra.mxu0 %v1160
        %1258 = vmatprep.subr.mxu0 %v1163
        %1259 = vmatpush1.msra.mxu0 %v1162
        %1260 = vmatprep.mubr.f32.mxu0 %v1087
        %1261 = vmatmul.mubr.f32.gmra.mrb[0].mxu0 %v1078
        %v1262 = vpop.f32.mrb[0].mxu0
        %v1263 = vadd.f32 0.0, %v1262
        %v1264 = vpop.f32.mrb[0].mxu0
        %v1265 = vadd.f32 0.0, %v1264
        %1266 = vmatprep.mubr.f32.mxu0 %v1089
        %1267 = vmatmul.mubr.f32.gmra.mrb[0].mxu0 %v1079
        %v1268 = vpop.f32.mrb[0].mxu0
        %v1269 = vadd.f32 0.0, %v1268
        %v1270 = vpop.f32.mrb[0].mxu0
        %v1271 = vadd.f32 0.0, %v1270
        %1272 = vdwg.mxu0
        %1273 = vmatprep.subr.mxu0 %v1165
        %1274 = vmatpush1.msra.mxu0 %v1164
        %1275 = vmatprep.subr.mxu0 %v1167
        %1276 = vmatpush1.msra.mxu0 %v1166
        %1277 = vmatprep.subr.mxu0 %v1169
        %1278 = vmatpush1.msra.mxu0 %v1168
        %1279 = vmatprep.subr.mxu0 %v1171
        %1280 = vmatpush1.msra.mxu0 %v1170
        %1281 = vmatprep.subr.mxu0 %v1173
        %1282 = vmatpush1.msra.mxu0 %v1172
        %1283 = vmatprep.subr.mxu0 %v1175
        %1284 = vmatpush1.msra.mxu0 %v1174
        %1285 = vmatprep.subr.mxu0 %v1177
        %1286 = vmatpush1.msra.mxu0 %v1176
        %1287 = vmatprep.subr.mxu0 %v1179
        %1288 = vmatpush1.msra.mxu0 %v1178
        %1289 = vmatprep.subr.mxu0 %v1181
        %1290 = vmatpush1.msra.mxu0 %v1180
        %1291 = vmatprep.subr.mxu0 %v1183
        %1292 = vmatpush1.msra.mxu0 %v1182
        %1293 = vmatprep.subr.mxu0 %v1185
        %1294 = vmatpush1.msra.mxu0 %v1184
        %1295 = vmatprep.subr.mxu0 %v1187
        %1296 = vmatpush1.msra.mxu0 %v1186
        %1297 = vmatprep.subr.mxu0 %v1189
        %1298 = vmatpush1.msra.mxu0 %v1188
        %1299 = vmatprep.subr.mxu0 %v1191
        %1300 = vmatpush1.msra.mxu0 %v1190
        %1301 = vmatprep.subr.mxu0 %v1193
        %1302 = vmatpush1.msra.mxu0 %v1192
        %1303 = vmatprep.subr.mxu0 %v1195
        %1304 = vmatpush1.msra.mxu0 %v1194
        %1305 = vmatprep.subr.mxu0 0.0
        %1306 = vmatpush1.msra.mxu0 0.0
        %1307 = vmatprep.subr.mxu0 0.0
        %1308 = vmatpush1.msra.mxu0 0.0
        %1309 = vmatprep.subr.mxu0 0.0
        %1310 = vmatpush1.msra.mxu0 0.0
        %1311 = vmatprep.subr.mxu0 0.0
        %1312 = vmatpush1.msra.mxu0 0.0
        %1313 = vmatprep.subr.mxu0 0.0
        %1314 = vmatpush1.msra.mxu0 0.0
        %1315 = vmatprep.subr.mxu0 0.0
        %1316 = vmatpush1.msra.mxu0 0.0
        %1317 = vmatprep.subr.mxu0 0.0
        %1318 = vmatpush1.msra.mxu0 0.0
        %1319 = vmatprep.subr.mxu0 0.0
        %1320 = vmatpush1.msra.mxu0 0.0
        %1321 = vmatprep.subr.mxu0 0.0
        %1322 = vmatpush1.msra.mxu0 0.0
        %1323 = vmatprep.subr.mxu0 0.0
        %1324 = vmatpush1.msra.mxu0 0.0
        %1325 = vmatprep.subr.mxu0 0.0
        %1326 = vmatpush1.msra.mxu0 0.0
        %1327 = vmatprep.subr.mxu0 0.0
        %1328 = vmatpush1.msra.mxu0 0.0
        %1329 = vmatprep.subr.mxu0 0.0
        %1330 = vmatpush1.msra.mxu0 0.0
        %1331 = vmatprep.subr.mxu0 0.0
        %1332 = vmatpush1.msra.mxu0 0.0
        %1333 = vmatprep.subr.mxu0 0.0
        %1334 = vmatpush1.msra.mxu0 0.0
        %1335 = vmatprep.subr.mxu0 0.0
        %1336 = vmatpush1.msra.mxu0 0.0
        %1337 = vmatprep.mubr.f32.mxu0 0.0
        %1338 = vmatmul.mubr.f32.gmra.mrb[0].mxu0 %v1095
        %v1339 = vpop.f32.mrb[0].mxu0
        %v1340 = vadd.f32 %v1263, %v1339
        %v1341 = vpop.f32.mrb[0].mxu0
        %v1342 = vadd.f32 %v1265, %v1341
        %1343 = vmatprep.mubr.f32.mxu0 0.0
        %1344 = vmatmul.mubr.f32.gmra.mrb[0].mxu0 %v1097
        %v1345 = vpop.f32.mrb[0].mxu0
        %v1346 = vadd.f32 %v1269, %v1345
        %v1347 = vpop.f32.mrb[0].mxu0
        %v1348 = vadd.f32 %v1271, %v1347
        %1349 = vdwg.mxu0
        %v1350 = vadd.f32 %v995, %v1340
        %v1351 = vadd.f32 %v997, %v1342
        %v1352 = vadd.f32 %v1001, %v1346
        %v1353 = vadd.f32 %v1003, %v1348
        %v1354 = vxor.u32 %v1350, 2147483648
        %v1355 = vxor.u32 %v1352, 2147483648
        %v1356 = vmul.f32 %v1354, 1.442695
        %v1357 = vpow.pop %v1356
        %v1358 = vmul.f32 %v1355, 1.442695
        %v1359 = vpow.pop %v1358
        %v1360 = vadd.f32 %v1357, 1.0
        %v1361 = vadd.f32 %v1359, 1.0
        %v1362 = vrcp.pop %v1360
        %v1363 = vmul.f32 1.0, %v1362
        %v1364 = vrcp.pop %v1361
        %v1365 = vmul.f32 1.0, %v1364
        %v1366 = vtanh.pop %v1351
        %v1367 = vtanh.pop %v1353
        %v1368 = vmul.f32 %v1363, %v1366
        %v1369 = vmul.f32 %v1365, %v1367
        %v1370 = vld [vmem:[#allocation7] sm:$0xff]
        %v1371 = vld [vmem:[#allocation7 + $0x8] sm:$0xff]
        %v1372 = vld [vmem:[#allocation7 + $0x10] sm:$0xff]
        %v1373 = vld [vmem:[#allocation7 + $0x18] sm:$0xff]
        %v1374 = vld [vmem:[#allocation7 + $0x20] sm:$0xff]
        %v1375 = vld [vmem:[#allocation7 + $0x28] sm:$0xff]
        %v1376 = vld [vmem:[#allocation7 + $0x30] sm:$0xff]
        %v1377 = vld [vmem:[#allocation7 + $0x38] sm:$0xff]
        %v1378 = vld [vmem:[#allocation7 + $0x40] sm:$0xff]
        %v1379 = vld [vmem:[#allocation7 + $0x48] sm:$0xff]
        %v1380 = vld [vmem:[#allocation7 + $0x50] sm:$0xff]
        %v1381 = vld [vmem:[#allocation7 + $0x58] sm:$0xff]
        %v1382 = vld [vmem:[#allocation7 + $0x60] sm:$0xff]
        %v1383 = vld [vmem:[#allocation7 + $0x68] sm:$0xff]
        %v1384 = vld [vmem:[#allocation7 + $0x70] sm:$0xff]
        %v1385 = vld [vmem:[#allocation7 + $0x78] sm:$0xff]
        %v1386 = vld [vmem:[#allocation7 + $0x80] sm:$0xff]
        %v1387 = vld [vmem:[#allocation7 + $0x88] sm:$0xff]
        %v1388 = vld [vmem:[#allocation7 + $0x90] sm:$0xff]
        %v1389 = vld [vmem:[#allocation7 + $0x98] sm:$0xff]
        %v1390 = vld [vmem:[#allocation7 + $0xa0] sm:$0xff]
        %v1391 = vld [vmem:[#allocation7 + $0xa8] sm:$0xff]
        %v1392 = vld [vmem:[#allocation7 + $0xb0] sm:$0xff]
        %v1393 = vld [vmem:[#allocation7 + $0xb8] sm:$0xff]
        %v1394 = vld [vmem:[#allocation7 + $0xc0] sm:$0xff]
        %v1395 = vld [vmem:[#allocation7 + $0xc8] sm:$0xff]
        %v1396 = vld [vmem:[#allocation7 + $0xd0] sm:$0xff]
        %v1397 = vld [vmem:[#allocation7 + $0xd8] sm:$0xff]
        %v1398 = vld [vmem:[#allocation7 + $0xe0] sm:$0xff]
        %v1399 = vld [vmem:[#allocation7 + $0xe8] sm:$0xff]
        %v1400 = vld [vmem:[#allocation7 + $0xf0] sm:$0xff]
        %v1401 = vld [vmem:[#allocation7 + $0xf8] sm:$0xff]
        %v1402 = vld [vmem:[%s7] sm:$0x3]
        %v1404 = vlaneseq
        %v1405 = vshrl.u32 %v1404, 7
        %v1406 = vsub.s32 0, %v1405
        %v1407 = vrot.slane %v1402, %v1406
        %v1408 = vlaneseq
        %v1409 = vshrl.u32 %v1408, 7
        %v1410 = vsub.s32 1, %v1409
        %v1411 = vrot.slane %v1402, %v1410
        %1414 = vmatprep.subr.mxu0 %v1371
        %1415 = vmatpush1.msra.mxu0 %v1370
        %1416 = vmatprep.subr.mxu0 %v1373
        %1417 = vmatpush1.msra.mxu0 %v1372
        %1418 = vmatprep.subr.mxu0 %v1375
        %1419 = vmatpush1.msra.mxu0 %v1374
        %1420 = vmatprep.subr.mxu0 %v1377
        %1421 = vmatpush1.msra.mxu0 %v1376
        %1422 = vmatprep.subr.mxu0 %v1379
        %1423 = vmatpush1.msra.mxu0 %v1378
        %1424 = vmatprep.subr.mxu0 %v1381
        %1425 = vmatpush1.msra.mxu0 %v1380
        %1426 = vmatprep.subr.mxu0 %v1383
        %1427 = vmatpush1.msra.mxu0 %v1382
        %1428 = vmatprep.subr.mxu0 %v1385
        %1429 = vmatpush1.msra.mxu0 %v1384
        %1430 = vmatprep.subr.mxu0 %v1387
        %1431 = vmatpush1.msra.mxu0 %v1386
        %1432 = vmatprep.subr.mxu0 %v1389
        %1433 = vmatpush1.msra.mxu0 %v1388
        %1434 = vmatprep.subr.mxu0 %v1391
        %1435 = vmatpush1.msra.mxu0 %v1390
        %1436 = vmatprep.subr.mxu0 %v1393
        %1437 = vmatpush1.msra.mxu0 %v1392
        %1438 = vmatprep.subr.mxu0 %v1395
        %1439 = vmatpush1.msra.mxu0 %v1394
        %1440 = vmatprep.subr.mxu0 %v1397
        %1441 = vmatpush1.msra.mxu0 %v1396
        %1442 = vmatprep.subr.mxu0 %v1399
        %1443 = vmatpush1.msra.mxu0 %v1398
        %1444 = vmatprep.subr.mxu0 %v1401
        %1445 = vmatpush1.msra.mxu0 %v1400
        %1446 = vmatprep.subr.mxu0 0.0
        %1447 = vmatpush1.msra.mxu0 0.0
        %1448 = vmatprep.subr.mxu0 0.0
        %1449 = vmatpush1.msra.mxu0 0.0
        %1450 = vmatprep.subr.mxu0 0.0
        %1451 = vmatpush1.msra.mxu0 0.0
        %1452 = vmatprep.subr.mxu0 0.0
        %1453 = vmatpush1.msra.mxu0 0.0
        %1454 = vmatprep.subr.mxu0 0.0
        %1455 = vmatpush1.msra.mxu0 0.0
        %1456 = vmatprep.subr.mxu0 0.0
        %1457 = vmatpush1.msra.mxu0 0.0
        %1458 = vmatprep.subr.mxu0 0.0
        %1459 = vmatpush1.msra.mxu0 0.0
        %1460 = vmatprep.subr.mxu0 0.0
        %1461 = vmatpush1.msra.mxu0 0.0
        %1462 = vmatprep.subr.mxu0 0.0
        %1463 = vmatpush1.msra.mxu0 0.0
        %1464 = vmatprep.subr.mxu0 0.0
        %1465 = vmatpush1.msra.mxu0 0.0
        %1466 = vmatprep.subr.mxu0 0.0
        %1467 = vmatpush1.msra.mxu0 0.0
        %1468 = vmatprep.subr.mxu0 0.0
        %1469 = vmatpush1.msra.mxu0 0.0
        %1470 = vmatprep.subr.mxu0 0.0
        %1471 = vmatpush1.msra.mxu0 0.0
        %1472 = vmatprep.subr.mxu0 0.0
        %1473 = vmatpush1.msra.mxu0 0.0
        %1474 = vmatprep.subr.mxu0 0.0
        %1475 = vmatpush1.msra.mxu0 0.0
        %1476 = vmatprep.subr.mxu0 0.0
        %1477 = vmatpush1.msra.mxu0 0.0
        %1478 = vmatprep.mubr.f32.mxu0 0.0
        %1479 = vmatmul.mubr.f32.gmra.mrb[0].mxu0 %v1368
        %v1480 = vpop.f32.mrb[0].mxu0
        %v1481 = vadd.f32 %v1407, %v1480
        %v1482 = vpop.f32.mrb[0].mxu0
        %v1483 = vadd.f32 %v1411, %v1482
        %1484 = vmatprep.mubr.f32.mxu0 0.0
        %1485 = vmatmul.mubr.f32.gmra.mrb[0].mxu0 %v1369
        %v1486 = vpop.f32.mrb[0].mxu0
        %v1487 = vadd.f32 %v1407, %v1486
        %v1488 = vpop.f32.mrb[0].mxu0
        %v1489 = vadd.f32 %v1411, %v1488
        %1490 = vdwg.mxu0
        %v1491 = vadd.f32 %v1368, %v1481
        %v1492 = vadd.f32 %v1369, %v1487
        %v1493 = vmul.f32 %v1491, 0.70710677
        %v1494 = vmul.f32 %v1492, 0.70710677
        %1495 = vst [vmem:[%s338] sm:$0xff] %v1493
        %1496 = vst [vmem:[%s338 + $0x10] sm:$0xff] %v1494
        %1497 = vst [vmem:[%s338 + $0x8] sm:$0xff] %v1483
        %1498 = vst [vmem:[%s338 + $0x18] sm:$0xff] %v1489
        %s1499 = sand.u32 %s205, 1
        %s1500 = scalar_lea.sflag [#allocation6], %s1499
        %s1501 = sand.u32 %s205, 1
        %s1502 = smul.addr %s1501, 32
        %s1503 = scalar_lea.vmem [#allocation9], %s1502
        // Predicated region
        $region405: #{tpu_custom_call.1} parent=47 // pred_check
          %p1504 = pneg %p215
        $region406: #{tpu_custom_call.1} parent=47 // pred_check_branch
          %1506 = sbr.rel (%p1504) target = $region408
        $region407: #{tpu_custom_call.1} parent=47 // pred_region
          %s1507 = smul.u32 2, %s29
          %s1509 = ssub.s32 512, 512
          %1510 = vsyncadd %s1500, %s1509
          %s1511 = smul.addr %s1507, 2
          %s1512 = smul.addr %s28, 16
          %s1513 = sadd.s32 %s1511, %s1512
          %s1514 = smul.addr %s1513, 128
          %s1515 = scalar_lea.hbm %s8, %s1514
          %s1516 = sshll.u32 %s1503, 4
          %s1517 = int_to_ptr.vmem [resolvable:$true] %s1516
          %1522 = dma.vmem_to_hbm [thread:$0]  %s1517, 512, %s1515, %s1500, 256, 256, 16
        $region408: #{tpu_custom_call.1} parent=47 // pred_fallthru
          _
      $region48: #{tpu_custom_call.1} parent=5 // pred_fallthru
        _
      %p1523 = scmp.le.s32.totalorder 2, %s19
      // Predicated region
      $region409: #{tpu_custom_call.1} parent=5 // pred_check
        %p1524 = pneg %p1523
      $region410: #{tpu_custom_call.1} parent=5 // pred_check_branch
        %1526 = sbr.rel (%p1524) target = $region412
      $region411: #{tpu_custom_call.1} parent=5 // pred_region
        %s1527 = ssub.s32 %s19, 2
        // Predicated region
        $region413: #{tpu_custom_call.1} parent=411 // pred_check
          %p1528 = pneg %p221
        $region414: #{tpu_custom_call.1} parent=411 // pred_check_branch
          %1530 = sbr.rel (%p1528) target = $region416
        $region415: #{tpu_custom_call.1} parent=411 // pred_region
          %s1531 = sand.u32 %s206, 1
          %s1532 = scalar_lea.sflag [#allocation6], %s1531
          %s1533 = sand.u32 %s206, 1
          %s1534 = smul.addr %s1533, 32
          %s1535 = scalar_lea.vmem [#allocation9], %s1534
          %1536 = dma.done %s1532, 512
        $region416: #{tpu_custom_call.1} parent=411 // pred_fallthru
          _
      $region412: #{tpu_custom_call.1} parent=5 // pred_fallthru
        _
    $region6: #{tpu_custom_call.1} parent=1 // loop_footer
      %s23 = sadd.s32 1, %s19
    $region7: #{tpu_custom_call.1} parent=1 // loop_footer_branch
      %18 = sbr.rel target = $region3
    $region8: #{tpu_custom_call.1} parent=1 // loop_exit
      _
    %1537 = vsyncpa [#allocation5], 1
    %s1538 = scalar_lea.sflag [#allocation5], 1
    %1539 = vsyncpa %s1538, 1
    %1540 = vsyncpa [#allocation8], 1
    %1541 = vsyncpa [#allocation6], 1
    %s1542 = scalar_lea.sflag [#allocation6], 1
    %1543 = vsyncpa %s1542, 1
  %1544 = vsyncmov [#allocation3]
  %s1545 = vpop.sfrf %1544
  %p1546 = scmp.eq.s32.totalorder %s1545, 0
  %p1547 = pneg %p1546
  %1549 = shalt.err (%p1547)
  %s1550 = scalar_lea.sflag [#allocation3], 1
  %1551 = vsyncmov %s1550
  %s1552 = vpop.sfrf %1551
  %p1553 = scmp.eq.s32.totalorder %s1552, 0
  %p1554 = pneg %p1553
  %1556 = shalt.err (%p1554)

</llo_original>
